<compile_context>
chip_gen: v7x
topology: tpu7x:2x2x1
jax: 0.10.0
libtpu: 0.0.40
codegen_flags: <defaults>
</compile_context>

<pallas_src>
import functools
import math

import numpy as np
import jax
import jax.numpy as jnp
from jax.experimental import pallas as pl
from jax.experimental.pallas import tpu as pltpu


# ---------------------------------------------------------------------------
# Deterministic "parameters" (same construction as the PyTorch __init__).
# ---------------------------------------------------------------------------
def gaussian_kernel_2d(kernel_size: int, sigma: float) -> np.ndarray:
    coords = np.arange(kernel_size, dtype=np.float32)
    x_grid = np.tile(coords, kernel_size).reshape(kernel_size, kernel_size)
    y_grid = x_grid.T
    mean = (kernel_size - 1) / 2.0
    variance = float(sigma) ** 2.0
    g = (1.0 / (2.0 * math.pi * variance)) * np.exp(
        -((x_grid - mean) ** 2 + (y_grid - mean) ** 2) / (2.0 * variance))
    return (g / g.sum()).astype(np.float32)


def gaussian_kernel_1d(kernel_size: int, sigma: float) -> np.ndarray:
    # The normalized 2-D Gaussian above is outer(g1d, g1d) up to ~1e-7 (f32
    # rounding of the normalization), well inside the test tolerance.
    coords = np.arange(kernel_size, dtype=np.float64)
    mean = (kernel_size - 1) / 2.0
    u = np.exp(-((coords - mean) ** 2) / (2.0 * float(sigma) ** 2))
    return (u / u.sum()).astype(np.float32)


K1_2D = np.array([[-1., -1., -1.], [-1., 9., -1.], [-1., -1., -1.]], np.float32)
K3_2D = np.array([[0., -1., 0.], [-1., 9., -1.], [0., -1., 0.]], np.float32)
G1_2D = gaussian_kernel_2d(9, 10.0)            # GaussBlur1 weight (reference)
G2_2D = gaussian_kernel_2d(9, 20.0)            # GaussBlur2 weight (reference)
G1_1D = gaussian_kernel_1d(9, 10.0)            # separable taps
G2_1D = gaussian_kernel_1d(9, 20.0)


def _round_up(x: int, m: int) -> int:
    return (x + m - 1) // m * m


def _pairwise_sum(terms):
    """Balanced pairwise reduction -> independent add chains (VALU ILP)."""
    terms = list(terms)
    while len(terms) > 1:
        nxt = [terms[i] + terms[i + 1] for i in range(0, len(terms) - 1, 2)]
        if len(terms) % 2:
            nxt.append(terms[-1])
        terms = nxt
    return terms[0]


def _choose_nb(B: int, C: int, W: int) -> int:
    """Batches folded per grid step so the lane-folded slab fills ~128 lanes."""
    ls = W + 4
    need_planes = -(-(128 - 4) // ls)            # planes to fill one vreg column
    nb = min(B, max(1, -(-need_planes // C)))
    while B % nb:                                # keep it a divisor of B
        nb -= 1
    return nb


def _make_band(H: int, HS: int) -> np.ndarray:
    """[Band(G1) | Band(G1)-Band(G2)]: column pass of the DoG as one matmul.

    dog = Band(G1) @ (hp1 - hp2) + (Band(G1) - Band(G2)) @ hp2
        = Band(G1) @ hp1 - Band(G2) @ hp2
    This formulation keeps the MXU accumulation numerically benign (no
    cancellation of two large nearly-equal blurs inside the matmul).
    """
    b1 = np.zeros((H, HS), np.float32)
    b2 = np.zeros((H, HS), np.float32)
    for i in range(H):
        for dy in range(9):
            j = i + dy - 4
            if 0 <= j < H:
                b1[i, j] = G1_1D[dy]
                b2[i, j] = G2_1D[dy]
    return np.concatenate([b1, b1 - b2], axis=1).astype(np.float32)


# ---------------------------------------------------------------------------
# Pallas kernel: NB*C lane-folded planes per grid step.
# ---------------------------------------------------------------------------
def _new_gauss_kernel(x_ref, band_ref, o_ref, sp_ref, s1_ref, hp_ref, *,
                      N, H, HS, W, LS, LA, PW, drow, g2row):
    # x_ref   : (H+2, PW)   lane-folded, zero-padded input slab (read only)
    # band_ref: (H, 2*HS)   [Band(G1) | Band(G1)-Band(G2)] column-pass matrix
    # o_ref   : (H, LA)     lane-dense output slab (plane p at lanes p*LS..+W)
    # sp_ref  : (H, PW)     parked sharpen result, 4-lane halos + plane gaps
    # s1_ref  : (H, LA)     K1 sharpen result (explicit live-range bound)
    # hp_ref  : (2*HS, LA)  row-pass results: rows [0,H)=hp1-hp2, [HS,HS+H)=hp2
    f32 = jnp.float32

    # Per-step zeroing: narrow halo / gap stripes only (no full-slab zero,
    # no iota validity mask).  Re-zeroed every step so scratch reuse across
    # grid steps / cores stays correct.
    sp_ref[:, 0:4] = jnp.zeros((H, 4), f32)                      # left halo
    sp_ref[:, 4 + LA:PW] = jnp.zeros((H, PW - 4 - LA), f32)      # right halo
    if H != HS:  # zero band-filler rows so 0 * <uninitialized> cannot be NaN
        hp_ref[H:HS, :] = jnp.zeros((HS - H, LA), f32)
        hp_ref[HS + H:2 * HS, :] = jnp.zeros((HS - H, LA), f32)

    def zero_gaps():
        for p in range(N - 1):
            sp_ref[:, 4 + p * LS + W:4 + (p + 1) * LS] = jnp.zeros((H, 4), f32)

    # --- 3x3 sharpens straight off the pre-padded input slab ----------------
    # K3 (cross) and K1 (full) share the centre + cross taps; K1 = K3 - corners.
    xv = {(dy, dx): x_ref[dy:dy + H, 3 + dx:3 + dx + LA]
          for dy in range(3) for dx in range(3)}
    cross = _pairwise_sum([xv[(0, 1)], xv[(1, 0)], xv[(1, 2)], xv[(2, 1)]])
    corners = _pairwise_sum([xv[(0, 0)], xv[(0, 2)], xv[(2, 0)], xv[(2, 2)]])
    s3 = 9.0 * xv[(1, 1)] - cross
    s1_ref[...] = s3 - corners          # park K1 sharpen (bounds live range)
    sp_ref[:, 4:4 + LA] = s3            # park K3 sharpen for the DoG row pass
    zero_gaps()                         # s at gap lanes is garbage -> re-zero

    # --- s * DoG(s): 9-tap row pass on VPU, 9-tap column pass on MXU --------
    def dog_of_parked_s():
        views = [sp_ref[:, dx:dx + LA] for dx in range(9)]    # shared by G1/G2
        hp_ref[0:H, :] = _pairwise_sum(
            [drow[dx] * views[dx] for dx in range(9)])         # rowpass(G1-G2)
        hp_ref[HS:HS + H, :] = _pairwise_sum(
            [g2row[dx] * views[dx] for dx in range(9)])        # rowpass(G2)
        return jnp.dot(band_ref[...], hp_ref[...],
                       preferred_element_type=jnp.float32,
                       precision=jax.lax.Precision.HIGHEST)

    # Pass 1: K3 sharpen.  Re-load s from sp_ref (bounds its live range).
    o_ref[...] = (sp_ref[:, 4:4 + LA] * dog_of_parked_s()).astype(o_ref.dtype)

    # Pass 2: K1 sharpen, accumulated directly into the output block.
    sp_ref[:, 4:4 + LA] = s1_ref[...]
    zero_gaps()
    o_ref[...] = (o_ref[...] +
                  sp_ref[:, 4:4 + LA] * dog_of_parked_s()).astype(o_ref.dtype)


def new_gauss_forward(x, *, nb=None):
    """x: (B, 3, H, W) float32, NCHW.  Returns (x, x_big + x_big2)."""
    B, C, H, W = x.shape
    assert C == 3, "module hardcodes 3-channel depthwise kernels"
    if nb is None:
        nb = _choose_nb(B, C, W)
    assert B % nb == 0
    G = B // nb                 # grid length (one step per NB-batch group)
    N = nb * C                  # planes folded along lanes per grid step
    LS = W + 4                  # per-plane lane stride (data + shared 4 gap)
    LA = N * LS - 4             # aligned working width
    PW = _round_up(LA + 8, 128)  # padded slab width (4-lane halos, 128-dense)
    HS = _round_up(H, 8)

    drow = [float(a) - float(b) for a, b in zip(G1_1D, G2_1D)]
    g2row = [float(v) for v in G2_1D]
    band = jnp.asarray(_make_band(H, HS))

    # Lane-fold + zero-pad x on the XLA side (layout plumbing only): plane
    # p = nb_i*C + c lands at padded lanes [4 + p*LS, 4 + p*LS + W), rows
    # [1, 1+H); everything else is zero.
    xf = x.reshape(G, N, H, W).astype(jnp.float32)
    xp = jnp.pad(xf, ((0, 0), (0, 0), (1, 1), (0, LS - W)))
    xp = xp.transpose(0, 2, 1, 3).reshape(G, H + 2, N * LS)
    xp = jnp.pad(xp, ((0, 0), (0, 0), (4, PW - 4 - N * LS)))

    kernel = functools.partial(
        _new_gauss_kernel, N=N, H=H, HS=HS, W=W, LS=LS, LA=LA, PW=PW,
        drow=drow, g2row=g2row)

    vmem_need = 4 * (2 * (H + 2) * PW + 2 * H * LA + H * 2 * HS
                     + H * PW + H * LA + 2 * HS * LA)
    vmem_limit = int(min(64 * 2 ** 20, max(32 * 2 ** 20, 2 * vmem_need)))

    elems = B * C * H * W
    out = pl.pallas_call(
        kernel,
        out_shape=jax.ShapeDtypeStruct((G, H, LA), jnp.float32),
        grid_spec=pltpu.PrefetchScalarGridSpec(
            num_scalar_prefetch=0,
            grid=(G,),
            in_specs=[
                pl.BlockSpec((None, H + 2, PW), lambda g: (g, 0, 0)),
                pl.BlockSpec((H, 2 * HS), lambda g: (0, 0)),
            ],
            out_specs=pl.BlockSpec((None, H, LA), lambda g: (g, 0, 0)),
            scratch_shapes=[
                pltpu.VMEM((H, PW), jnp.float32),        # parked s (s3 then s1)
                pltpu.VMEM((H, LA), jnp.float32),        # s1 spill
                pltpu.VMEM((2 * HS, LA), jnp.float32),   # merged row-pass hp
            ],
        ),
        compiler_params=pltpu.CompilerParams(
            dimension_semantics=("parallel",),
            vmem_limit_bytes=vmem_limit),
        cost_estimate=pl.CostEstimate(
            flops=4 * elems * (32 + 2 * HS), transcendentals=0,
            bytes_accessed=4 * (G * (H + 2) * PW + G * H * LA + H * 2 * HS)),
    )(xp, band)

    # Lane-dense kernel output -> (B, C, H, W) gather (cheap XLA slicing).
    slab = jnp.pad(out, ((0, 0), (0, 0), (0, LS - W)))       # (G, H, N*LS)
    big = slab.reshape(G, H, N, LS)[..., :W]                 # (G, H, N, W)
    big = big.transpose(0, 2, 1, 3).reshape(B, C, H, W).astype(x.dtype)
    return x, big


# ---------------------------------------------------------------------------
# Pure-JAX reference (lax convs, 2-D kernels exactly as in the PyTorch module).
# ---------------------------------------------------------------------------
def _depthwise(x, w2d, pad):
    C = x.shape[1]
    w = jnp.asarray(np.broadcast_to(w2d, (C, 1) + w2d.shape).copy())
    return jax.lax.conv_general_dilated(
        x, w, window_strides=(1, 1), padding=[(pad, pad), (pad, pad)],
        dimension_numbers=("NCHW", "OIHW", "NCHW"), feature_group_count=C,
        precision=jax.lax.Precision.HIGHEST)


def _reference(x):
    s3 = _depthwise(x, K3_2D, 1)
    d3 = _depthwise(s3, G1_2D, 4) - _depthwise(s3, G2_2D, 4)
    s1 = _depthwise(x, K1_2D, 1)
    d1 = _depthwise(s1, G1_2D, 4) - _depthwise(s1, G2_2D, 4)
    return s3 * d3 + s1 * d1


if __name__ == "__main__":
    key = jax.random.PRNGKey(0)
    x = jax.random.normal(key, (2, 3, 16, 16), dtype=jnp.float32)

    x_out, big_out = jax.jit(new_gauss_forward)(x)
    jax.block_until_ready((x_out, big_out))

    ref = _reference(x)
    assert x_out.shape == x.shape and big_out.shape == x.shape
    np.testing.assert_allclose(np.asarray(big_out), np.asarray(ref),
                               rtol=1e-3, atol=1e-3)
    np.testing.assert_allclose(np.asarray(x_out), np.asarray(x))

    print("KERNEL_OK")
</pallas_src>

<mosaic_0001>
module attributes {stable_mosaic.version = 11 : i64} {
  func.func @_new_gauss_kernel(%arg0: i32, %arg1: memref<1x18x128xf32, #tpu.memory_space<vmem>>, %arg2: memref<16x32xf32, #tpu.memory_space<vmem>>, %arg3: memref<1x16x116xf32, #tpu.memory_space<vmem>>, %arg4: memref<16x128xf32, #tpu.memory_space<vmem>>, %arg5: memref<16x116xf32, #tpu.memory_space<vmem>>, %arg6: memref<32x116xf32, #tpu.memory_space<vmem>>) attributes {dimension_semantics = [#tpu.dimension_semantics<parallel>], iteration_bounds = array<i64: 1>, scalar_prefetch = 0 : i64, scratch_operands = 3 : i64, tpu.core_type = #tpu.core_type<tc>, window_params = [{transform_indices = @transform_0, window_bounds = array<i64: 1, 18, 128>}, {pipeline_mode = #tpu.pipeline_mode<synchronous>, transform_indices = @transform_1, window_bounds = array<i64: 16, 32>}, {transform_indices = @transform_2, window_bounds = array<i64: 1, 16, 116>}]} {
    %cst = arith.constant 0.000000e+00 : f32
    %0 = vector.broadcast %cst : f32 to vector<16x4xf32>
    %c0 = arith.constant 0 : index
    %c0_0 = arith.constant 0 : index
    %1 = vector.load %arg4[%c0, %c0_0] : memref<16x128xf32, #tpu.memory_space<vmem>>, vector<16x4xf32>
    tpu.vector_store %arg4[%c0, %c0_0], %0 {strides = array<i32>} : memref<16x128xf32, #tpu.memory_space<vmem>>, vector<16x4xf32>,
    %cst_1 = arith.constant 0.000000e+00 : f32
    %2 = vector.broadcast %cst_1 : f32 to vector<16x8xf32>
    %c0_2 = arith.constant 0 : index
    %c120 = arith.constant 120 : index
    %3 = vector.load %arg4[%c0_2, %c120] : memref<16x128xf32, #tpu.memory_space<vmem>>, vector<16x8xf32>
    tpu.vector_store %arg4[%c0_2, %c120], %2 {strides = array<i32>} : memref<16x128xf32, #tpu.memory_space<vmem>>, vector<16x8xf32>,
    %c0_3 = arith.constant 0 : index
    %c0_4 = arith.constant 0 : index
    %c3 = arith.constant 3 : index
    %4 = vector.load %arg1[%c0_3, %c0_4, %c3] : memref<1x18x128xf32, #tpu.memory_space<vmem>>, vector<1x16x116xf32>
    %5 = vector.shape_cast %4 : vector<1x16x116xf32> to vector<16x116xf32>
    %c0_5 = arith.constant 0 : index
    %c0_6 = arith.constant 0 : index
    %c4 = arith.constant 4 : index
    %6 = vector.load %arg1[%c0_5, %c0_6, %c4] : memref<1x18x128xf32, #tpu.memory_space<vmem>>, vector<1x16x116xf32>
    %7 = vector.shape_cast %6 : vector<1x16x116xf32> to vector<16x116xf32>
    %c0_7 = arith.constant 0 : index
    %c0_8 = arith.constant 0 : index
    %c5 = arith.constant 5 : index
    %8 = vector.load %arg1[%c0_7, %c0_8, %c5] : memref<1x18x128xf32, #tpu.memory_space<vmem>>, vector<1x16x116xf32>
    %9 = vector.shape_cast %8 : vector<1x16x116xf32> to vector<16x116xf32>
    %c0_9 = arith.constant 0 : index
    %c1 = arith.constant 1 : index
    %c3_10 = arith.constant 3 : index
    %10 = vector.load %arg1[%c0_9, %c1, %c3_10] : memref<1x18x128xf32, #tpu.memory_space<vmem>>, vector<1x16x116xf32>
    %11 = vector.shape_cast %10 : vector<1x16x116xf32> to vector<16x116xf32>
    %c0_11 = arith.constant 0 : index
    %c1_12 = arith.constant 1 : index
    %c4_13 = arith.constant 4 : index
    %12 = vector.load %arg1[%c0_11, %c1_12, %c4_13] : memref<1x18x128xf32, #tpu.memory_space<vmem>>, vector<1x16x116xf32>
    %13 = vector.shape_cast %12 : vector<1x16x116xf32> to vector<16x116xf32>
    %c0_14 = arith.constant 0 : index
    %c1_15 = arith.constant 1 : index
    %c5_16 = arith.constant 5 : index
    %14 = vector.load %arg1[%c0_14, %c1_15, %c5_16] : memref<1x18x128xf32, #tpu.memory_space<vmem>>, vector<1x16x116xf32>
    %15 = vector.shape_cast %14 : vector<1x16x116xf32> to vector<16x116xf32>
    %c0_17 = arith.constant 0 : index
    %c2 = arith.constant 2 : index
    %c3_18 = arith.constant 3 : index
    %16 = vector.load %arg1[%c0_17, %c2, %c3_18] : memref<1x18x128xf32, #tpu.memory_space<vmem>>, vector<1x16x116xf32>
    %17 = vector.shape_cast %16 : vector<1x16x116xf32> to vector<16x116xf32>
    %c0_19 = arith.constant 0 : index
    %c2_20 = arith.constant 2 : index
    %c4_21 = arith.constant 4 : index
    %18 = vector.load %arg1[%c0_19, %c2_20, %c4_21] : memref<1x18x128xf32, #tpu.memory_space<vmem>>, vector<1x16x116xf32>
    %19 = vector.shape_cast %18 : vector<1x16x116xf32> to vector<16x116xf32>
    %c0_22 = arith.constant 0 : index
    %c2_23 = arith.constant 2 : index
    %c5_24 = arith.constant 5 : index
    %20 = vector.load %arg1[%c0_22, %c2_23, %c5_24] : memref<1x18x128xf32, #tpu.memory_space<vmem>>, vector<1x16x116xf32>
    %21 = vector.shape_cast %20 : vector<1x16x116xf32> to vector<16x116xf32>
    %22 = arith.addf %7, %11 : vector<16x116xf32>
    %23 = arith.addf %15, %19 : vector<16x116xf32>
    %24 = arith.addf %22, %23 : vector<16x116xf32>
    %25 = arith.addf %5, %9 : vector<16x116xf32>
    %26 = arith.addf %17, %21 : vector<16x116xf32>
    %27 = arith.addf %25, %26 : vector<16x116xf32>
    %cst_25 = arith.constant 9.000000e+00 : f32
    %28 = vector.broadcast %cst_25 : f32 to vector<16x116xf32>
    %29 = arith.mulf %28, %13 : vector<16x116xf32>
    %30 = arith.subf %29, %24 : vector<16x116xf32>
    %31 = arith.subf %30, %27 : vector<16x116xf32>
    %c0_26 = arith.constant 0 : index
    %c0_27 = arith.constant 0 : index
    %32 = vector.load %arg5[%c0_26, %c0_27] : memref<16x116xf32, #tpu.memory_space<vmem>>, vector<16x116xf32>
    tpu.vector_store %arg5[%c0_26, %c0_27], %31 {strides = array<i32>} : memref<16x116xf32, #tpu.memory_space<vmem>>, vector<16x116xf32>,
    %c0_28 = arith.constant 0 : index
    %c4_29 = arith.constant 4 : index
    %33 = vector.load %arg4[%c0_28, %c4_29] : memref<16x128xf32, #tpu.memory_space<vmem>>, vector<16x116xf32>
    tpu.vector_store %arg4[%c0_28, %c4_29], %30 {strides = array<i32>} : memref<16x128xf32, #tpu.memory_space<vmem>>, vector<16x116xf32>,
    %cst_30 = arith.constant 0.000000e+00 : f32
    %34 = vector.broadcast %cst_30 : f32 to vector<16x4xf32>
    %c0_31 = arith.constant 0 : index
    %c20 = arith.constant 20 : index
    %35 = vector.load %arg4[%c0_31, %c20] : memref<16x128xf32, #tpu.memory_space<vmem>>, vector<16x4xf32>
    tpu.vector_store %arg4[%c0_31, %c20], %34 {strides = array<i32>} : memref<16x128xf32, #tpu.memory_space<vmem>>, vector<16x4xf32>,
    %cst_32 = arith.constant 0.000000e+00 : f32
    %36 = vector.broadcast %cst_32 : f32 to vector<16x4xf32>
    %c0_33 = arith.constant 0 : index
    %c40 = arith.constant 40 : index
    %37 = vector.load %arg4[%c0_33, %c40] : memref<16x128xf32, #tpu.memory_space<vmem>>, vector<16x4xf32>
    tpu.vector_store %arg4[%c0_33, %c40], %36 {strides = array<i32>} : memref<16x128xf32, #tpu.memory_space<vmem>>, vector<16x4xf32>,
    %cst_34 = arith.constant 0.000000e+00 : f32
    %38 = vector.broadcast %cst_34 : f32 to vector<16x4xf32>
    %c0_35 = arith.constant 0 : index
    %c60 = arith.constant 60 : index
    %39 = vector.load %arg4[%c0_35, %c60] : memref<16x128xf32, #tpu.memory_space<vmem>>, vector<16x4xf32>
    tpu.vector_store %arg4[%c0_35, %c60], %38 {strides = array<i32>} : memref<16x128xf32, #tpu.memory_space<vmem>>, vector<16x4xf32>,
    %cst_36 = arith.constant 0.000000e+00 : f32
    %40 = vector.broadcast %cst_36 : f32 to vector<16x4xf32>
    %c0_37 = arith.constant 0 : index
    %c80 = arith.constant 80 : index
    %41 = vector.load %arg4[%c0_37, %c80] : memref<16x128xf32, #tpu.memory_space<vmem>>, vector<16x4xf32>
    tpu.vector_store %arg4[%c0_37, %c80], %40 {strides = array<i32>} : memref<16x128xf32, #tpu.memory_space<vmem>>, vector<16x4xf32>,
    %cst_38 = arith.constant 0.000000e+00 : f32
    %42 = vector.broadcast %cst_38 : f32 to vector<16x4xf32>
    %c0_39 = arith.constant 0 : index
    %c100 = arith.constant 100 : index
    %43 = vector.load %arg4[%c0_39, %c100] : memref<16x128xf32, #tpu.memory_space<vmem>>, vector<16x4xf32>
    tpu.vector_store %arg4[%c0_39, %c100], %42 {strides = array<i32>} : memref<16x128xf32, #tpu.memory_space<vmem>>, vector<16x4xf32>,
    %c0_40 = arith.constant 0 : index
    %c4_41 = arith.constant 4 : index
    %44 = vector.load %arg4[%c0_40, %c4_41] : memref<16x128xf32, #tpu.memory_space<vmem>>, vector<16x116xf32>
    %c0_42 = arith.constant 0 : index
    %c0_43 = arith.constant 0 : index
    %45 = vector.load %arg4[%c0_42, %c0_43] : memref<16x128xf32, #tpu.memory_space<vmem>>, vector<16x116xf32>
    %c0_44 = arith.constant 0 : index
    %c1_45 = arith.constant 1 : index
    %46 = vector.load %arg4[%c0_44, %c1_45] : memref<16x128xf32, #tpu.memory_space<vmem>>, vector<16x116xf32>
    %c0_46 = arith.constant 0 : index
    %c2_47 = arith.constant 2 : index
    %47 = vector.load %arg4[%c0_46, %c2_47] : memref<16x128xf32, #tpu.memory_space<vmem>>, vector<16x116xf32>
    %c0_48 = arith.constant 0 : index
    %c3_49 = arith.constant 3 : index
    %48 = vector.load %arg4[%c0_48, %c3_49] : memref<16x128xf32, #tpu.memory_space<vmem>>, vector<16x116xf32>
    %c0_50 = arith.constant 0 : index
    %c4_51 = arith.constant 4 : index
    %49 = vector.load %arg4[%c0_50, %c4_51] : memref<16x128xf32, #tpu.memory_space<vmem>>, vector<16x116xf32>
    %c0_52 = arith.constant 0 : index
    %c5_53 = arith.constant 5 : index
    %50 = vector.load %arg4[%c0_52, %c5_53] : memref<16x128xf32, #tpu.memory_space<vmem>>, vector<16x116xf32>
    %c0_54 = arith.constant 0 : index
    %c6 = arith.constant 6 : index
    %51 = vector.load %arg4[%c0_54, %c6] : memref<16x128xf32, #tpu.memory_space<vmem>>, vector<16x116xf32>
    %c0_55 = arith.constant 0 : index
    %c7 = arith.constant 7 : index
    %52 = vector.load %arg4[%c0_55, %c7] : memref<16x128xf32, #tpu.memory_space<vmem>>, vector<16x116xf32>
    %c0_56 = arith.constant 0 : index
    %c8 = arith.constant 8 : index
    %53 = vector.load %arg4[%c0_56, %c8] : memref<16x128xf32, #tpu.memory_space<vmem>>, vector<16x116xf32>
    %cst_57 = arith.constant -0.00381947309 : f32
    %54 = vector.broadcast %cst_57 : f32 to vector<16x116xf32>
    %55 = arith.mulf %54, %45 : vector<16x116xf32>
    %cst_58 = arith.constant -0.00100892782 : f32
    %56 = vector.broadcast %cst_58 : f32 to vector<16x116xf32>
    %57 = arith.mulf %56, %46 : vector<16x116xf32>
    %cst_59 = arith.constant 0.00107548386 : f32
    %58 = vector.broadcast %cst_59 : f32 to vector<16x116xf32>
    %59 = arith.mulf %58, %47 : vector<16x116xf32>
    %cst_60 = arith.constant 0.00235769898 : f32
    %60 = vector.broadcast %cst_60 : f32 to vector<16x116xf32>
    %61 = arith.mulf %60, %48 : vector<16x116xf32>
    %cst_61 = arith.constant 0.00279045105 : f32
    %62 = vector.broadcast %cst_61 : f32 to vector<16x116xf32>
    %63 = arith.mulf %62, %49 : vector<16x116xf32>
    %cst_62 = arith.constant 0.00235769898 : f32
    %64 = vector.broadcast %cst_62 : f32 to vector<16x116xf32>
    %65 = arith.mulf %64, %50 : vector<16x116xf32>
    %cst_63 = arith.constant 0.00107548386 : f32
    %66 = vector.broadcast %cst_63 : f32 to vector<16x116xf32>
    %67 = arith.mulf %66, %51 : vector<16x116xf32>
    %cst_64 = arith.constant -0.00100892782 : f32
    %68 = vector.broadcast %cst_64 : f32 to vector<16x116xf32>
    %69 = arith.mulf %68, %52 : vector<16x116xf32>
    %cst_65 = arith.constant -0.00381947309 : f32
    %70 = vector.broadcast %cst_65 : f32 to vector<16x116xf32>
    %71 = arith.mulf %70, %53 : vector<16x116xf32>
    %72 = arith.addf %55, %57 : vector<16x116xf32>
    %73 = arith.addf %59, %61 : vector<16x116xf32>
    %74 = arith.addf %63, %65 : vector<16x116xf32>
    %75 = arith.addf %67, %69 : vector<16x116xf32>
    %76 = arith.addf %72, %73 : vector<16x116xf32>
    %77 = arith.addf %74, %75 : vector<16x116xf32>
    %78 = arith.addf %76, %77 : vector<16x116xf32>
    %79 = arith.addf %78, %71 : vector<16x116xf32>
    %c0_66 = arith.constant 0 : index
    %c0_67 = arith.constant 0 : index
    %80 = vector.load %arg6[%c0_66, %c0_67] : memref<32x116xf32, #tpu.memory_space<vmem>>, vector<16x116xf32>
    tpu.vector_store %arg6[%c0_66, %c0_67], %79 {strides = array<i32>} : memref<32x116xf32, #tpu.memory_space<vmem>>, vector<16x116xf32>,
    %cst_68 = arith.constant 0.109819412 : f32
    %81 = vector.broadcast %cst_68 : f32 to vector<16x116xf32>
    %82 = arith.mulf %81, %45 : vector<16x116xf32>
    %cst_69 = arith.constant 0.110784553 : f32
    %83 = vector.broadcast %cst_69 : f32 to vector<16x116xf32>
    %84 = arith.mulf %83, %46 : vector<16x116xf32>
    %cst_70 = arith.constant 0.111479126 : f32
    %85 = vector.broadcast %cst_70 : f32 to vector<16x116xf32>
    %86 = arith.mulf %85, %47 : vector<16x116xf32>
    %cst_71 = arith.constant 0.111897953 : f32
    %87 = vector.broadcast %cst_71 : f32 to vector<16x116xf32>
    %88 = arith.mulf %87, %48 : vector<16x116xf32>
    %cst_72 = arith.constant 0.112037912 : f32
    %89 = vector.broadcast %cst_72 : f32 to vector<16x116xf32>
    %90 = arith.mulf %89, %49 : vector<16x116xf32>
    %cst_73 = arith.constant 0.111897953 : f32
    %91 = vector.broadcast %cst_73 : f32 to vector<16x116xf32>
    %92 = arith.mulf %91, %50 : vector<16x116xf32>
    %cst_74 = arith.constant 0.111479126 : f32
    %93 = vector.broadcast %cst_74 : f32 to vector<16x116xf32>
    %94 = arith.mulf %93, %51 : vector<16x116xf32>
    %cst_75 = arith.constant 0.110784553 : f32
    %95 = vector.broadcast %cst_75 : f32 to vector<16x116xf32>
    %96 = arith.mulf %95, %52 : vector<16x116xf32>
    %cst_76 = arith.constant 0.109819412 : f32
    %97 = vector.broadcast %cst_76 : f32 to vector<16x116xf32>
    %98 = arith.mulf %97, %53 : vector<16x116xf32>
    %99 = arith.addf %82, %84 : vector<16x116xf32>
    %100 = arith.addf %86, %88 : vector<16x116xf32>
    %101 = arith.addf %90, %92 : vector<16x116xf32>
    %102 = arith.addf %94, %96 : vector<16x116xf32>
    %103 = arith.addf %99, %100 : vector<16x116xf32>
    %104 = arith.addf %101, %102 : vector<16x116xf32>
    %105 = arith.addf %103, %104 : vector<16x116xf32>
    %106 = arith.addf %105, %98 : vector<16x116xf32>
    %c16 = arith.constant 16 : index
    %c0_77 = arith.constant 0 : index
    %107 = vector.load %arg6[%c16, %c0_77] : memref<32x116xf32, #tpu.memory_space<vmem>>, vector<16x116xf32>
    tpu.vector_store %arg6[%c16, %c0_77], %106 {strides = array<i32>} : memref<32x116xf32, #tpu.memory_space<vmem>>, vector<16x116xf32>,
    %c0_78 = arith.constant 0 : index
    %c0_79 = arith.constant 0 : index
    %108 = vector.load %arg2[%c0_78, %c0_79] : memref<16x32xf32, #tpu.memory_space<vmem>>, vector<16x32xf32>
    %c0_80 = arith.constant 0 : index
    %c0_81 = arith.constant 0 : index
    %109 = vector.load %arg6[%c0_80, %c0_81] : memref<32x116xf32, #tpu.memory_space<vmem>>, vector<32x116xf32>
    %cst_82 = arith.constant dense<0.000000e+00> : vector<16x116xf32>
    %110 = tpu.matmul %108, %109, %cst_82 {dimension_numbers = #tpu.dot_dimension_numbers<[1], [0], [0], [1], [0, 0, 1, 1], [], []>, precision = #tpu.contract_precision<fp32>} : vector<16x32xf32>, vector<32x116xf32>, vector<16x116xf32> -> vector<16x116xf32>
    %111 = arith.mulf %44, %110 : vector<16x116xf32>
    %c0_83 = arith.constant 0 : index
    %c0_84 = arith.constant 0 : index
    %c0_85 = arith.constant 0 : index
    %112 = vector.load %arg3[%c0_83, %c0_84, %c0_85] : memref<1x16x116xf32, #tpu.memory_space<vmem>>, vector<1x16x116xf32>
    %113 = vector.shape_cast %112 : vector<1x16x116xf32> to vector<16x116xf32>
    %114 = vector.shape_cast %111 : vector<16x116xf32> to vector<1x16x116xf32>
    tpu.vector_store %arg3[%c0_83, %c0_84, %c0_85], %114 {strides = array<i32>} : memref<1x16x116xf32, #tpu.memory_space<vmem>>, vector<1x16x116xf32>,
    %c0_86 = arith.constant 0 : index
    %c0_87 = arith.constant 0 : index
    %115 = vector.load %arg5[%c0_86, %c0_87] : memref<16x116xf32, #tpu.memory_space<vmem>>, vector<16x116xf32>
    %c0_88 = arith.constant 0 : index
    %c4_89 = arith.constant 4 : index
    %116 = vector.load %arg4[%c0_88, %c4_89] : memref<16x128xf32, #tpu.memory_space<vmem>>, vector<16x116xf32>
    tpu.vector_store %arg4[%c0_88, %c4_89], %115 {strides = array<i32>} : memref<16x128xf32, #tpu.memory_space<vmem>>, vector<16x116xf32>,
    %cst_90 = arith.constant 0.000000e+00 : f32
    %117 = vector.broadcast %cst_90 : f32 to vector<16x4xf32>
    %c0_91 = arith.constant 0 : index
    %c20_92 = arith.constant 20 : index
    %118 = vector.load %arg4[%c0_91, %c20_92] : memref<16x128xf32, #tpu.memory_space<vmem>>, vector<16x4xf32>
    tpu.vector_store %arg4[%c0_91, %c20_92], %117 {strides = array<i32>} : memref<16x128xf32, #tpu.memory_space<vmem>>, vector<16x4xf32>,
    %cst_93 = arith.constant 0.000000e+00 : f32
    %119 = vector.broadcast %cst_93 : f32 to vector<16x4xf32>
    %c0_94 = arith.constant 0 : index
    %c40_95 = arith.constant 40 : index
    %120 = vector.load %arg4[%c0_94, %c40_95] : memref<16x128xf32, #tpu.memory_space<vmem>>, vector<16x4xf32>
    tpu.vector_store %arg4[%c0_94, %c40_95], %119 {strides = array<i32>} : memref<16x128xf32, #tpu.memory_space<vmem>>, vector<16x4xf32>,
    %cst_96 = arith.constant 0.000000e+00 : f32
    %121 = vector.broadcast %cst_96 : f32 to vector<16x4xf32>
    %c0_97 = arith.constant 0 : index
    %c60_98 = arith.constant 60 : index
    %122 = vector.load %arg4[%c0_97, %c60_98] : memref<16x128xf32, #tpu.memory_space<vmem>>, vector<16x4xf32>
    tpu.vector_store %arg4[%c0_97, %c60_98], %121 {strides = array<i32>} : memref<16x128xf32, #tpu.memory_space<vmem>>, vector<16x4xf32>,
    %cst_99 = arith.constant 0.000000e+00 : f32
    %123 = vector.broadcast %cst_99 : f32 to vector<16x4xf32>
    %c0_100 = arith.constant 0 : index
    %c80_101 = arith.constant 80 : index
    %124 = vector.load %arg4[%c0_100, %c80_101] : memref<16x128xf32, #tpu.memory_space<vmem>>, vector<16x4xf32>
    tpu.vector_store %arg4[%c0_100, %c80_101], %123 {strides = array<i32>} : memref<16x128xf32, #tpu.memory_space<vmem>>, vector<16x4xf32>,
    %cst_102 = arith.constant 0.000000e+00 : f32
    %125 = vector.broadcast %cst_102 : f32 to vector<16x4xf32>
    %c0_103 = arith.constant 0 : index
    %c100_104 = arith.constant 100 : index
    %126 = vector.load %arg4[%c0_103, %c100_104] : memref<16x128xf32, #tpu.memory_space<vmem>>, vector<16x4xf32>
    tpu.vector_store %arg4[%c0_103, %c100_104], %125 {strides = array<i32>} : memref<16x128xf32, #tpu.memory_space<vmem>>, vector<16x4xf32>,
    %c0_105 = arith.constant 0 : index
    %c0_106 = arith.constant 0 : index
    %c0_107 = arith.constant 0 : index
    %127 = vector.load %arg3[%c0_105, %c0_106, %c0_107] : memref<1x16x116xf32, #tpu.memory_space<vmem>>, vector<1x16x116xf32>
    %128 = vector.shape_cast %127 : vector<1x16x116xf32> to vector<16x116xf32>
    %c0_108 = arith.constant 0 : index
    %c4_109 = arith.constant 4 : index
    %129 = vector.load %arg4[%c0_108, %c4_109] : memref<16x128xf32, #tpu.memory_space<vmem>>, vector<16x116xf32>
    %c0_110 = arith.constant 0 : index
    %c0_111 = arith.constant 0 : index
    %130 = vector.load %arg4[%c0_110, %c0_111] : memref<16x128xf32, #tpu.memory_space<vmem>>, vector<16x116xf32>
    %c0_112 = arith.constant 0 : index
    %c1_113 = arith.constant 1 : index
    %131 = vector.load %arg4[%c0_112, %c1_113] : memref<16x128xf32, #tpu.memory_space<vmem>>, vector<16x116xf32>
    %c0_114 = arith.constant 0 : index
    %c2_115 = arith.constant 2 : index
    %132 = vector.load %arg4[%c0_114, %c2_115] : memref<16x128xf32, #tpu.memory_space<vmem>>, vector<16x116xf32>
    %c0_116 = arith.constant 0 : index
    %c3_117 = arith.constant 3 : index
    %133 = vector.load %arg4[%c0_116, %c3_117] : memref<16x128xf32, #tpu.memory_space<vmem>>, vector<16x116xf32>
    %c0_118 = arith.constant 0 : index
    %c4_119 = arith.constant 4 : index
    %134 = vector.load %arg4[%c0_118, %c4_119] : memref<16x128xf32, #tpu.memory_space<vmem>>, vector<16x116xf32>
    %c0_120 = arith.constant 0 : index
    %c5_121 = arith.constant 5 : index
    %135 = vector.load %arg4[%c0_120, %c5_121] : memref<16x128xf32, #tpu.memory_space<vmem>>, vector<16x116xf32>
    %c0_122 = arith.constant 0 : index
    %c6_123 = arith.constant 6 : index
    %136 = vector.load %arg4[%c0_122, %c6_123] : memref<16x128xf32, #tpu.memory_space<vmem>>, vector<16x116xf32>
    %c0_124 = arith.constant 0 : index
    %c7_125 = arith.constant 7 : index
    %137 = vector.load %arg4[%c0_124, %c7_125] : memref<16x128xf32, #tpu.memory_space<vmem>>, vector<16x116xf32>
    %c0_126 = arith.constant 0 : index
    %c8_127 = arith.constant 8 : index
    %138 = vector.load %arg4[%c0_126, %c8_127] : memref<16x128xf32, #tpu.memory_space<vmem>>, vector<16x116xf32>
    %cst_128 = arith.constant -0.00381947309 : f32
    %139 = vector.broadcast %cst_128 : f32 to vector<16x116xf32>
    %140 = arith.mulf %139, %130 : vector<16x116xf32>
    %cst_129 = arith.constant -0.00100892782 : f32
    %141 = vector.broadcast %cst_129 : f32 to vector<16x116xf32>
    %142 = arith.mulf %141, %131 : vector<16x116xf32>
    %cst_130 = arith.constant 0.00107548386 : f32
    %143 = vector.broadcast %cst_130 : f32 to vector<16x116xf32>
    %144 = arith.mulf %143, %132 : vector<16x116xf32>
    %cst_131 = arith.constant 0.00235769898 : f32
    %145 = vector.broadcast %cst_131 : f32 to vector<16x116xf32>
    %146 = arith.mulf %145, %133 : vector<16x116xf32>
    %cst_132 = arith.constant 0.00279045105 : f32
    %147 = vector.broadcast %cst_132 : f32 to vector<16x116xf32>
    %148 = arith.mulf %147, %134 : vector<16x116xf32>
    %cst_133 = arith.constant 0.00235769898 : f32
    %149 = vector.broadcast %cst_133 : f32 to vector<16x116xf32>
    %150 = arith.mulf %149, %135 : vector<16x116xf32>
    %cst_134 = arith.constant 0.00107548386 : f32
    %151 = vector.broadcast %cst_134 : f32 to vector<16x116xf32>
    %152 = arith.mulf %151, %136 : vector<16x116xf32>
    %cst_135 = arith.constant -0.00100892782 : f32
    %153 = vector.broadcast %cst_135 : f32 to vector<16x116xf32>
    %154 = arith.mulf %153, %137 : vector<16x116xf32>
    %cst_136 = arith.constant -0.00381947309 : f32
    %155 = vector.broadcast %cst_136 : f32 to vector<16x116xf32>
    %156 = arith.mulf %155, %138 : vector<16x116xf32>
    %157 = arith.addf %140, %142 : vector<16x116xf32>
    %158 = arith.addf %144, %146 : vector<16x116xf32>
    %159 = arith.addf %148, %150 : vector<16x116xf32>
    %160 = arith.addf %152, %154 : vector<16x116xf32>
    %161 = arith.addf %157, %158 : vector<16x116xf32>
    %162 = arith.addf %159, %160 : vector<16x116xf32>
    %163 = arith.addf %161, %162 : vector<16x116xf32>
    %164 = arith.addf %163, %156 : vector<16x116xf32>
    %c0_137 = arith.constant 0 : index
    %c0_138 = arith.constant 0 : index
    %165 = vector.load %arg6[%c0_137, %c0_138] : memref<32x116xf32, #tpu.memory_space<vmem>>, vector<16x116xf32>
    tpu.vector_store %arg6[%c0_137, %c0_138], %164 {strides = array<i32>} : memref<32x116xf32, #tpu.memory_space<vmem>>, vector<16x116xf32>,
    %cst_139 = arith.constant 0.109819412 : f32
    %166 = vector.broadcast %cst_139 : f32 to vector<16x116xf32>
    %167 = arith.mulf %166, %130 : vector<16x116xf32>
    %cst_140 = arith.constant 0.110784553 : f32
    %168 = vector.broadcast %cst_140 : f32 to vector<16x116xf32>
    %169 = arith.mulf %168, %131 : vector<16x116xf32>
    %cst_141 = arith.constant 0.111479126 : f32
    %170 = vector.broadcast %cst_141 : f32 to vector<16x116xf32>
    %171 = arith.mulf %170, %132 : vector<16x116xf32>
    %cst_142 = arith.constant 0.111897953 : f32
    %172 = vector.broadcast %cst_142 : f32 to vector<16x116xf32>
    %173 = arith.mulf %172, %133 : vector<16x116xf32>
    %cst_143 = arith.constant 0.112037912 : f32
    %174 = vector.broadcast %cst_143 : f32 to vector<16x116xf32>
    %175 = arith.mulf %174, %134 : vector<16x116xf32>
    %cst_144 = arith.constant 0.111897953 : f32
    %176 = vector.broadcast %cst_144 : f32 to vector<16x116xf32>
    %177 = arith.mulf %176, %135 : vector<16x116xf32>
    %cst_145 = arith.constant 0.111479126 : f32
    %178 = vector.broadcast %cst_145 : f32 to vector<16x116xf32>
    %179 = arith.mulf %178, %136 : vector<16x116xf32>
    %cst_146 = arith.constant 0.110784553 : f32
    %180 = vector.broadcast %cst_146 : f32 to vector<16x116xf32>
    %181 = arith.mulf %180, %137 : vector<16x116xf32>
    %cst_147 = arith.constant 0.109819412 : f32
    %182 = vector.broadcast %cst_147 : f32 to vector<16x116xf32>
    %183 = arith.mulf %182, %138 : vector<16x116xf32>
    %184 = arith.addf %167, %169 : vector<16x116xf32>
    %185 = arith.addf %171, %173 : vector<16x116xf32>
    %186 = arith.addf %175, %177 : vector<16x116xf32>
    %187 = arith.addf %179, %181 : vector<16x116xf32>
    %188 = arith.addf %184, %185 : vector<16x116xf32>
    %189 = arith.addf %186, %187 : vector<16x116xf32>
    %190 = arith.addf %188, %189 : vector<16x116xf32>
    %191 = arith.addf %190, %183 : vector<16x116xf32>
    %c16_148 = arith.constant 16 : index
    %c0_149 = arith.constant 0 : index
    %192 = vector.load %arg6[%c16_148, %c0_149] : memref<32x116xf32, #tpu.memory_space<vmem>>, vector<16x116xf32>
    tpu.vector_store %arg6[%c16_148, %c0_149], %191 {strides = array<i32>} : memref<32x116xf32, #tpu.memory_space<vmem>>, vector<16x116xf32>,
    %c0_150 = arith.constant 0 : index
    %c0_151 = arith.constant 0 : index
    %193 = vector.load %arg2[%c0_150, %c0_151] : memref<16x32xf32, #tpu.memory_space<vmem>>, vector<16x32xf32>
    %c0_152 = arith.constant 0 : index
    %c0_153 = arith.constant 0 : index
    %194 = vector.load %arg6[%c0_152, %c0_153] : memref<32x116xf32, #tpu.memory_space<vmem>>, vector<32x116xf32>
    %cst_154 = arith.constant dense<0.000000e+00> : vector<16x116xf32>
    %195 = tpu.matmul %193, %194, %cst_154 {dimension_numbers = #tpu.dot_dimension_numbers<[1], [0], [0], [1], [0, 0, 1, 1], [], []>, precision = #tpu.contract_precision<fp32>} : vector<16x32xf32>, vector<32x116xf32>, vector<16x116xf32> -> vector<16x116xf32>
    %196 = arith.mulf %129, %195 : vector<16x116xf32>
    %197 = arith.addf %128, %196 : vector<16x116xf32>
    %c0_155 = arith.constant 0 : index
    %c0_156 = arith.constant 0 : index
    %c0_157 = arith.constant 0 : index
    %198 = vector.load %arg3[%c0_155, %c0_156, %c0_157] : memref<1x16x116xf32, #tpu.memory_space<vmem>>, vector<1x16x116xf32>
    %199 = vector.shape_cast %198 : vector<1x16x116xf32> to vector<16x116xf32>
    %200 = vector.shape_cast %197 : vector<16x116xf32> to vector<1x16x116xf32>
    tpu.vector_store %arg3[%c0_155, %c0_156, %c0_157], %200 {strides = array<i32>} : memref<1x16x116xf32, #tpu.memory_space<vmem>>, vector<1x16x116xf32>,
    return
  }
  func.func @transform_0(%arg0: i32) -> (i32, i32, i32) {
    %c0_i32 = arith.constant 0 : i32
    %c0_i32_0 = arith.constant 0 : i32
    %c0_i32_1 = arith.constant 0 : i32
    return %arg0, %c0_i32, %c0_i32_0 : i32, i32, i32
  }
  func.func @transform_1(%arg0: i32) -> (i32, i32) {
    %c0_i32 = arith.constant 0 : i32
    %c0_i32_0 = arith.constant 0 : i32
    %c0_i32_1 = arith.constant 0 : i32
    return %c0_i32, %c0_i32_0 : i32, i32
  }
  func.func @transform_2(%arg0: i32) -> (i32, i32, i32) {
    %c0_i32 = arith.constant 0 : i32
    %c0_i32_0 = arith.constant 0 : i32
    %c0_i32_1 = arith.constant 0 : i32
    return %arg0, %c0_i32, %c0_i32_0 : i32, i32, i32
  }
}

</mosaic_0001>

<llo_original>
// kernel: new_gauss_forward.1
$region0: #{new_gauss_forward.1}
  #allocation0 [shape = 'u32[]', space=smem, size = 0x4, offset = 0x4, fixed_abs, tag = 'smem constant byte address 0x4 - core index']
  #allocation1 [shape = 'u32[144,128]{1,0:T(1,128)}', space=vmem, size = 0x12000, scoped, tag = 'internal scratch']
  #allocation2 [shape = 'f32[16,128]{1,0:T(8,128)}', space=vmem, size = 0x2000, scoped, tag = 'scratch operand']
  #allocation3 [shape = 'f32[16,116]{1,0:T(8,128)}', space=vmem, size = 0x2000, scoped, tag = 'scratch operand']
  #allocation4 [shape = 'f32[32,116]{1,0:T(8,128)}', space=vmem, size = 0x4000, scoped, tag = 'scratch operand']
  %s0 = inlined_call_operand.vmem [shape: f32[1,18,128], index: 0, kind: input, shape index: {}]
  %s1 = inlined_call_operand.vmem [shape: f32[16,32], index: 1, kind: input, shape index: {}]
  %s2 = inlined_call_operand.vmem [shape: f32[1,16,116], index: 2, kind: output, shape index: {}]
  %s3 = sld [smem:[#allocation0]]
  $region18: #{new_gauss_forward.1} parent=0
    _
  %s5 = ssub.s32 1, %s3
  %s6 = scalar_select 0, %s5, %s3
  // Predicated region
  $region2: #{new_gauss_forward.1} parent=0 // pred_check
    _
  $region3: #{new_gauss_forward.1} parent=0 // pred_check_branch
    %8 = sbr.rel (0) target = $region5
  $region4: #{new_gauss_forward.1} parent=0 // pred_region
    _
  $region5: #{new_gauss_forward.1} parent=0 // pred_fallthru
    _
  // Predicated region
  $region6: #{new_gauss_forward.1} parent=0 // pred_check
    _
  $region7: #{new_gauss_forward.1} parent=0 // pred_check_branch
    %10 = sbr.rel (0) target = $region9
  $region8: #{new_gauss_forward.1} parent=0 // pred_region
    _
  $region9: #{new_gauss_forward.1} parent=0 // pred_fallthru
    _
  %vm11 = vcmask 31744
  %12 = vst.msk [vmem:[#allocation2] sm:$0xff] %vm11, 0.0
  %13 = vst.msk [vmem:[#allocation2 + $0x8] sm:$0xff] %vm11, 0.0
  %vm14 = vcmask 1048512
  %15 = vst.msk [vmem:[#allocation2] sm:$0xff] %vm14, 0.0
  %16 = vst.msk [vmem:[#allocation2 + $0x8] sm:$0xff] %vm14, 0.0
  %v17 = vld [vmem:[%s0] sm:$0xff]
  %v18 = vld [vmem:[%s0 + $0x8] sm:$0xff]
  %v19 = vld [vmem:[%s0 + $0x1] sm:$0xff]
  %v20 = vld [vmem:[%s0 + $0x9] sm:$0xff]
  %v21 = vld [vmem:[%s0 + $0x2] sm:$0xff]
  %v22 = vld [vmem:[%s0 + $0xa] sm:$0xff]
  %25 = vrot.lane.b32.xlu0 %v19, 1
  %v26 = vpop.permute.xlu0 %25
  %27 = vrot.lane.b32.xlu0 %v20, 1
  %v28 = vpop.permute.xlu0 %27
  %v31 = vadd.f32 %v17, %v26
  %v32 = vadd.f32 %v18, %v28
  %35 = vrot.lane.b32.xlu0 %v21, 1
  %v36 = vpop.permute.xlu0 %35
  %37 = vrot.lane.b32.xlu0 %v22, 1
  %v38 = vpop.permute.xlu0 %37
  %v41 = vadd.f32 %v19, %v36
  %v42 = vadd.f32 %v20, %v38
  %45 = vrot.lane.b32.xlu0 %v41, 127
  %v46 = vpop.permute.xlu0 %45
  %47 = vrot.lane.b32.xlu0 %v42, 127
  %v48 = vpop.permute.xlu0 %47
  %v51 = vadd.f32 %v31, %v46
  %v52 = vadd.f32 %v32, %v48
  %55 = vrot.lane.b32.xlu0 %v17, 126
  %v56 = vpop.permute.xlu0 %55
  %57 = vrot.lane.b32.xlu0 %v18, 126
  %v58 = vpop.permute.xlu0 %57
  %v61 = vadd.f32 %v17, %v56
  %v62 = vadd.f32 %v18, %v58
  %63 = vrot.lane.b32.xlu0 %v21, 126
  %v64 = vpop.permute.xlu0 %63
  %65 = vrot.lane.b32.xlu0 %v22, 126
  %v66 = vpop.permute.xlu0 %65
  %v69 = vadd.f32 %v21, %v64
  %v70 = vadd.f32 %v22, %v66
  %v71 = vadd.f32 %v61, %v69
  %v72 = vadd.f32 %v62, %v70
  %v73 = vmul.f32 %v19, 9.0
  %v74 = vmul.f32 %v20, 9.0
  %v75 = vsub.f32 %v73, %v51
  %v76 = vsub.f32 %v74, %v52
  %79 = vrot.lane.b32.xlu0 %v71, 1
  %v80 = vpop.permute.xlu0 %79
  %81 = vrot.lane.b32.xlu0 %v72, 1
  %v82 = vpop.permute.xlu0 %81
  %v85 = vsub.f32 %v75, %v80
  %v86 = vsub.f32 %v76, %v82
  %89 = vrot.lane.b32.xlu0 %v85, 124
  %v90 = vpop.permute.xlu0 %89
  %91 = vrot.lane.b32.xlu0 %v86, 124
  %v92 = vpop.permute.xlu0 %91
  %vm95 = vcmask 949248
  %96 = vst.msk [vmem:[#allocation3] sm:$0xff] %vm95, %v90
  %97 = vst.msk [vmem:[#allocation3 + $0x8] sm:$0xff] %vm95, %v92
  %vm98 = vcmask 982048
  %99 = vst.msk [vmem:[#allocation2] sm:$0xff] %vm98, %v75
  %100 = vst.msk [vmem:[#allocation2 + $0x8] sm:$0xff] %vm98, %v76
  %vm101 = vcmask 195744
  %102 = vst.msk [vmem:[#allocation2] sm:$0xff] %vm101, 0.0
  %103 = vst.msk [vmem:[#allocation2 + $0x8] sm:$0xff] %vm101, 0.0
  %vm104 = vcmask 359744
  %105 = vst.msk [vmem:[#allocation2] sm:$0xff] %vm104, 0.0
  %106 = vst.msk [vmem:[#allocation2 + $0x8] sm:$0xff] %vm104, 0.0
  %vm107 = vcmask 523744
  %108 = vst.msk [vmem:[#allocation2] sm:$0xff] %vm107, 0.0
  %109 = vst.msk [vmem:[#allocation2 + $0x8] sm:$0xff] %vm107, 0.0
  %vm110 = vcmask 687744
  %111 = vst.msk [vmem:[#allocation2] sm:$0xff] %vm110, 0.0
  %112 = vst.msk [vmem:[#allocation2 + $0x8] sm:$0xff] %vm110, 0.0
  %vm113 = vcmask 851744
  %114 = vst.msk [vmem:[#allocation2] sm:$0xff] %vm113, 0.0
  %115 = vst.msk [vmem:[#allocation2 + $0x8] sm:$0xff] %vm113, 0.0
  %v116 = vld [vmem:[#allocation2] sm:$0xff]
  %v117 = vld [vmem:[#allocation2 + $0x8] sm:$0xff]
  %v118 = vmul.f32 %v116, -0.003819473
  %v119 = vmul.f32 %v117, -0.003819473
  %v120 = vmul.f32 %v116, -0.0010089278
  %v121 = vmul.f32 %v117, -0.0010089278
  %v122 = vmul.f32 %v116, 0.0010754839
  %v123 = vmul.f32 %v117, 0.0010754839
  %v124 = vmul.f32 %v116, 0.002357699
  %v125 = vmul.f32 %v117, 0.002357699
  %v126 = vmul.f32 %v116, 0.002790451
  %v127 = vmul.f32 %v117, 0.002790451
  %130 = vrot.lane.b32.xlu0 %v120, 127
  %v131 = vpop.permute.xlu0 %130
  %132 = vrot.lane.b32.xlu0 %v121, 127
  %v133 = vpop.permute.xlu0 %132
  %v136 = vadd.f32 %v118, %v131
  %v137 = vadd.f32 %v119, %v133
  %140 = vrot.lane.b32.xlu0 %v124, 127
  %v141 = vpop.permute.xlu0 %140
  %142 = vrot.lane.b32.xlu0 %v125, 127
  %v143 = vpop.permute.xlu0 %142
  %v146 = vadd.f32 %v122, %v141
  %v147 = vadd.f32 %v123, %v143
  %v148 = vadd.f32 %v126, %v141
  %v149 = vadd.f32 %v127, %v143
  %v150 = vadd.f32 %v122, %v131
  %v151 = vadd.f32 %v123, %v133
  %154 = vrot.lane.b32.xlu0 %v146, 126
  %v155 = vpop.permute.xlu0 %154
  %156 = vrot.lane.b32.xlu0 %v147, 126
  %v157 = vpop.permute.xlu0 %156
  %v160 = vadd.f32 %v136, %v155
  %v161 = vadd.f32 %v137, %v157
  %164 = vrot.lane.b32.xlu0 %v150, 126
  %v165 = vpop.permute.xlu0 %164
  %166 = vrot.lane.b32.xlu0 %v151, 126
  %v167 = vpop.permute.xlu0 %166
  %v170 = vadd.f32 %v148, %v165
  %v171 = vadd.f32 %v149, %v167
  %174 = vrot.lane.b32.xlu0 %v170, 124
  %v175 = vpop.permute.xlu0 %174
  %176 = vrot.lane.b32.xlu0 %v171, 124
  %v177 = vpop.permute.xlu0 %176
  %v180 = vadd.f32 %v160, %v175
  %v181 = vadd.f32 %v161, %v177
  %184 = vrot.lane.b32.xlu0 %v118, 120
  %v185 = vpop.permute.xlu0 %184
  %186 = vrot.lane.b32.xlu0 %v119, 120
  %v187 = vpop.permute.xlu0 %186
  %v190 = vadd.f32 %v180, %v185
  %v191 = vadd.f32 %v181, %v187
  %192 = vst.msk [vmem:[#allocation4] sm:$0xff] %vm95, %v190
  %193 = vst.msk [vmem:[#allocation4 + $0x8] sm:$0xff] %vm95, %v191
  %v194 = vmul.f32 %v116, 0.10981941
  %v195 = vmul.f32 %v117, 0.10981941
  %v196 = vmul.f32 %v116, 0.11078455
  %v197 = vmul.f32 %v117, 0.11078455
  %v198 = vmul.f32 %v116, 0.111479126
  %v199 = vmul.f32 %v117, 0.111479126
  %v200 = vmul.f32 %v116, 0.11189795
  %v201 = vmul.f32 %v117, 0.11189795
  %v202 = vmul.f32 %v116, 0.11203791
  %v203 = vmul.f32 %v117, 0.11203791
  %206 = vrot.lane.b32.xlu0 %v196, 127
  %v207 = vpop.permute.xlu0 %206
  %208 = vrot.lane.b32.xlu0 %v197, 127
  %v209 = vpop.permute.xlu0 %208
  %v212 = vadd.f32 %v194, %v207
  %v213 = vadd.f32 %v195, %v209
  %216 = vrot.lane.b32.xlu0 %v200, 127
  %v217 = vpop.permute.xlu0 %216
  %218 = vrot.lane.b32.xlu0 %v201, 127
  %v219 = vpop.permute.xlu0 %218
  %v222 = vadd.f32 %v198, %v217
  %v223 = vadd.f32 %v199, %v219
  %v224 = vadd.f32 %v202, %v217
  %v225 = vadd.f32 %v203, %v219
  %v226 = vadd.f32 %v198, %v207
  %v227 = vadd.f32 %v199, %v209
  %230 = vrot.lane.b32.xlu0 %v222, 126
  %v231 = vpop.permute.xlu0 %230
  %232 = vrot.lane.b32.xlu0 %v223, 126
  %v233 = vpop.permute.xlu0 %232
  %v236 = vadd.f32 %v212, %v231
  %v237 = vadd.f32 %v213, %v233
  %240 = vrot.lane.b32.xlu0 %v226, 126
  %v241 = vpop.permute.xlu0 %240
  %242 = vrot.lane.b32.xlu0 %v227, 126
  %v243 = vpop.permute.xlu0 %242
  %v246 = vadd.f32 %v224, %v241
  %v247 = vadd.f32 %v225, %v243
  %250 = vrot.lane.b32.xlu0 %v246, 124
  %v251 = vpop.permute.xlu0 %250
  %252 = vrot.lane.b32.xlu0 %v247, 124
  %v253 = vpop.permute.xlu0 %252
  %v256 = vadd.f32 %v236, %v251
  %v257 = vadd.f32 %v237, %v253
  %260 = vrot.lane.b32.xlu0 %v194, 120
  %v261 = vpop.permute.xlu0 %260
  %262 = vrot.lane.b32.xlu0 %v195, 120
  %v263 = vpop.permute.xlu0 %262
  %v266 = vadd.f32 %v256, %v261
  %v267 = vadd.f32 %v257, %v263
  %268 = vst.msk [vmem:[#allocation4 + $0x10] sm:$0xff] %vm95, %v266
  %269 = vst.msk [vmem:[#allocation4 + $0x18] sm:$0xff] %vm95, %v267
  %v270 = vld [vmem:[%s1] sm:$0xff]
  %v271 = vld [vmem:[%s1 + $0x8] sm:$0xff]
  %v272 = vld [vmem:[#allocation4] sm:$0xff]
  %v273 = vld [vmem:[#allocation4 + $0x8] sm:$0xff]
  %v274 = vld [vmem:[#allocation4 + $0x10] sm:$0xff]
  %v275 = vld [vmem:[#allocation4 + $0x18] sm:$0xff]
  %vm276 = vcmask 261120
  %v278 = vsel %vm276, %v270, 0
  %v281 = vsel %vm276, %v271, 0
  %283 = vmatprep.subr.mxu0 0.0
  %v284 = vand.u32 %v272, 4294901760
  %285 = vmatpush1.msra.mxu0 %v284
  %286 = vmatprep.subr.mxu0 0.0
  %v287 = vand.u32 %v273, 4294901760
  %288 = vmatpush1.msra.mxu0 %v287
  %289 = vmatprep.subr.mxu0 0.0
  %v290 = vand.u32 %v274, 4294901760
  %291 = vmatpush1.msra.mxu0 %v290
  %292 = vmatprep.subr.mxu0 0.0
  %v293 = vand.u32 %v275, 4294901760
  %294 = vmatpush1.msra.mxu0 %v293
  %295 = vmatprep.subr.mxu0 0.0
  %296 = vmatpush1.msra.mxu0 0.0
  %297 = vmatprep.subr.mxu0 0.0
  %298 = vmatpush1.msra.mxu0 0.0
  %299 = vmatprep.subr.mxu0 0.0
  %300 = vmatpush1.msra.mxu0 0.0
  %301 = vmatprep.subr.mxu0 0.0
  %302 = vmatpush1.msra.mxu0 0.0
  %303 = vmatprep.subr.mxu0 0.0
  %304 = vmatpush1.msra.mxu0 0.0
  %305 = vmatprep.subr.mxu0 0.0
  %306 = vmatpush1.msra.mxu0 0.0
  %307 = vmatprep.subr.mxu0 0.0
  %308 = vmatpush1.msra.mxu0 0.0
  %309 = vmatprep.subr.mxu0 0.0
  %310 = vmatpush1.msra.mxu0 0.0
  %311 = vmatprep.subr.mxu0 0.0
  %312 = vmatpush1.msra.mxu0 0.0
  %313 = vmatprep.subr.mxu0 0.0
  %314 = vmatpush1.msra.mxu0 0.0
  %315 = vmatprep.subr.mxu0 0.0
  %316 = vmatpush1.msra.mxu0 0.0
  %317 = vmatprep.subr.mxu0 0.0
  %318 = vmatpush1.msra.mxu0 0.0
  %319 = vmatprep.subr.mxu0 0.0
  %320 = vmatpush1.msra.mxu0 0.0
  %321 = vmatprep.subr.mxu0 0.0
  %322 = vmatpush1.msra.mxu0 0.0
  %323 = vmatprep.subr.mxu0 0.0
  %324 = vmatpush1.msra.mxu0 0.0
  %325 = vmatprep.subr.mxu0 0.0
  %326 = vmatpush1.msra.mxu0 0.0
  %327 = vmatprep.subr.mxu0 0.0
  %328 = vmatpush1.msra.mxu0 0.0
  %329 = vmatprep.subr.mxu0 0.0
  %330 = vmatpush1.msra.mxu0 0.0
  %331 = vmatprep.subr.mxu0 0.0
  %332 = vmatpush1.msra.mxu0 0.0
  %333 = vmatprep.subr.mxu0 0.0
  %334 = vmatpush1.msra.mxu0 0.0
  %335 = vmatprep.subr.mxu0 0.0
  %336 = vmatpush1.msra.mxu0 0.0
  %337 = vmatprep.subr.mxu0 0.0
  %338 = vmatpush1.msra.mxu0 0.0
  %339 = vmatprep.subr.mxu0 0.0
  %340 = vmatpush1.msra.mxu0 0.0
  %341 = vmatprep.subr.mxu0 0.0
  %342 = vmatpush1.msra.mxu0 0.0
  %343 = vmatprep.subr.mxu0 0.0
  %344 = vmatpush1.msra.mxu0 0.0
  %345 = vmatprep.subr.mxu0 0.0
  %346 = vmatpush1.msra.mxu0 0.0
  %347 = vmatprep.subr.mxu0 0.0
  %348 = vmatpush1.msra.mxu0 0.0
  %349 = vmatprep.subr.mxu0 0.0
  %350 = vmatpush1.msra.mxu0 0.0
  %351 = vmatprep.mubr.f32.mxu0 0.0
  %v352 = vand.u32 %v278, 4294901760
  %v353 = vsub.f32 %v278, %v352
  %v354 = vand.u32 %v353, 4294901760
  %v355 = vsub.f32 %v353, %v354
  %v356 = vand.u32 %v355, 4294901760
  %357 = vmatmul.mubr.f32.gmra.mrb[0].mxu0 %v356
  %v358 = vpop.f32.mrb[0].mxu0
  %v359 = vadd.f32 0.0, %v358
  %v360 = vpop.f32.mrb[0].mxu0
  %361 = vmatprep.mubr.f32.mxu0 0.0
  %v362 = vand.u32 %v281, 4294901760
  %v363 = vsub.f32 %v281, %v362
  %v364 = vand.u32 %v363, 4294901760
  %v365 = vsub.f32 %v363, %v364
  %v366 = vand.u32 %v365, 4294901760
  %367 = vmatmul.mubr.f32.gmra.mrb[0].mxu0 %v366
  %v368 = vpop.f32.mrb[0].mxu0
  %v369 = vadd.f32 0.0, %v368
  %v370 = vpop.f32.mrb[0].mxu0
  %371 = vdwg.mxu0
  %372 = vmatprep.subr.mxu0 0.0
  %v373 = vand.u32 %v272, 4294901760
  %v374 = vsub.f32 %v272, %v373
  %v375 = vand.u32 %v374, 4294901760
  %v376 = vsub.f32 %v374, %v375
  %v377 = vand.u32 %v376, 4294901760
  %378 = vmatpush1.msra.mxu0 %v377
  %379 = vmatprep.subr.mxu0 0.0
  %v380 = vand.u32 %v273, 4294901760
  %v381 = vsub.f32 %v273, %v380
  %v382 = vand.u32 %v381, 4294901760
  %v383 = vsub.f32 %v381, %v382
  %v384 = vand.u32 %v383, 4294901760
  %385 = vmatpush1.msra.mxu0 %v384
  %386 = vmatprep.subr.mxu0 0.0
  %v387 = vand.u32 %v274, 4294901760
  %v388 = vsub.f32 %v274, %v387
  %v389 = vand.u32 %v388, 4294901760
  %v390 = vsub.f32 %v388, %v389
  %v391 = vand.u32 %v390, 4294901760
  %392 = vmatpush1.msra.mxu0 %v391
  %393 = vmatprep.subr.mxu0 0.0
  %v394 = vand.u32 %v275, 4294901760
  %v395 = vsub.f32 %v275, %v394
  %v396 = vand.u32 %v395, 4294901760
  %v397 = vsub.f32 %v395, %v396
  %v398 = vand.u32 %v397, 4294901760
  %399 = vmatpush1.msra.mxu0 %v398
  %400 = vmatprep.subr.mxu0 0.0
  %401 = vmatpush1.msra.mxu0 0.0
  %402 = vmatprep.subr.mxu0 0.0
  %403 = vmatpush1.msra.mxu0 0.0
  %404 = vmatprep.subr.mxu0 0.0
  %405 = vmatpush1.msra.mxu0 0.0
  %406 = vmatprep.subr.mxu0 0.0
  %407 = vmatpush1.msra.mxu0 0.0
  %408 = vmatprep.subr.mxu0 0.0
  %409 = vmatpush1.msra.mxu0 0.0
  %410 = vmatprep.subr.mxu0 0.0
  %411 = vmatpush1.msra.mxu0 0.0
  %412 = vmatprep.subr.mxu0 0.0
  %413 = vmatpush1.msra.mxu0 0.0
  %414 = vmatprep.subr.mxu0 0.0
  %415 = vmatpush1.msra.mxu0 0.0
  %416 = vmatprep.subr.mxu0 0.0
  %417 = vmatpush1.msra.mxu0 0.0
  %418 = vmatprep.subr.mxu0 0.0
  %419 = vmatpush1.msra.mxu0 0.0
  %420 = vmatprep.subr.mxu0 0.0
  %421 = vmatpush1.msra.mxu0 0.0
  %422 = vmatprep.subr.mxu0 0.0
  %423 = vmatpush1.msra.mxu0 0.0
  %424 = vmatprep.subr.mxu0 0.0
  %425 = vmatpush1.msra.mxu0 0.0
  %426 = vmatprep.subr.mxu0 0.0
  %427 = vmatpush1.msra.mxu0 0.0
  %428 = vmatprep.subr.mxu0 0.0
  %429 = vmatpush1.msra.mxu0 0.0
  %430 = vmatprep.subr.mxu0 0.0
  %431 = vmatpush1.msra.mxu0 0.0
  %432 = vmatprep.subr.mxu0 0.0
  %433 = vmatpush1.msra.mxu0 0.0
  %434 = vmatprep.subr.mxu0 0.0
  %435 = vmatpush1.msra.mxu0 0.0
  %436 = vmatprep.subr.mxu0 0.0
  %437 = vmatpush1.msra.mxu0 0.0
  %438 = vmatprep.subr.mxu0 0.0
  %439 = vmatpush1.msra.mxu0 0.0
  %440 = vmatprep.subr.mxu0 0.0
  %441 = vmatpush1.msra.mxu0 0.0
  %442 = vmatprep.subr.mxu0 0.0
  %443 = vmatpush1.msra.mxu0 0.0
  %444 = vmatprep.subr.mxu0 0.0
  %445 = vmatpush1.msra.mxu0 0.0
  %446 = vmatprep.subr.mxu0 0.0
  %447 = vmatpush1.msra.mxu0 0.0
  %448 = vmatprep.subr.mxu0 0.0
  %449 = vmatpush1.msra.mxu0 0.0
  %450 = vmatprep.subr.mxu0 0.0
  %451 = vmatpush1.msra.mxu0 0.0
  %452 = vmatprep.subr.mxu0 0.0
  %453 = vmatpush1.msra.mxu0 0.0
  %454 = vmatprep.subr.mxu0 0.0
  %455 = vmatpush1.msra.mxu0 0.0
  %456 = vmatprep.mubr.f32.mxu0 0.0
  %v457 = vand.u32 %v278, 4294901760
  %458 = vmatmul.mubr.f32.gmra.mrb[0].mxu0 %v457
  %v459 = vpop.f32.mrb[0].mxu0
  %v460 = vadd.f32 %v359, %v459
  %v461 = vpop.f32.mrb[0].mxu0
  %462 = vmatprep.mubr.f32.mxu0 0.0
  %v463 = vand.u32 %v281, 4294901760
  %464 = vmatmul.mubr.f32.gmra.mrb[0].mxu0 %v463
  %v465 = vpop.f32.mrb[0].mxu0
  %v466 = vadd.f32 %v369, %v465
  %v467 = vpop.f32.mrb[0].mxu0
  %468 = vdwg.mxu0
  %469 = vmatprep.subr.mxu0 0.0
  %v470 = vand.u32 %v272, 4294901760
  %v471 = vsub.f32 %v272, %v470
  %472 = vmatpush1.msra.mxu0 %v471
  %473 = vmatprep.subr.mxu0 0.0
  %v474 = vand.u32 %v273, 4294901760
  %v475 = vsub.f32 %v273, %v474
  %476 = vmatpush1.msra.mxu0 %v475
  %477 = vmatprep.subr.mxu0 0.0
  %v478 = vand.u32 %v274, 4294901760
  %v479 = vsub.f32 %v274, %v478
  %480 = vmatpush1.msra.mxu0 %v479
  %481 = vmatprep.subr.mxu0 0.0
  %v482 = vand.u32 %v275, 4294901760
  %v483 = vsub.f32 %v275, %v482
  %484 = vmatpush1.msra.mxu0 %v483
  %485 = vmatprep.subr.mxu0 0.0
  %486 = vmatpush1.msra.mxu0 0.0
  %487 = vmatprep.subr.mxu0 0.0
  %488 = vmatpush1.msra.mxu0 0.0
  %489 = vmatprep.subr.mxu0 0.0
  %490 = vmatpush1.msra.mxu0 0.0
  %491 = vmatprep.subr.mxu0 0.0
  %492 = vmatpush1.msra.mxu0 0.0
  %493 = vmatprep.subr.mxu0 0.0
  %494 = vmatpush1.msra.mxu0 0.0
  %495 = vmatprep.subr.mxu0 0.0
  %496 = vmatpush1.msra.mxu0 0.0
  %497 = vmatprep.subr.mxu0 0.0
  %498 = vmatpush1.msra.mxu0 0.0
  %499 = vmatprep.subr.mxu0 0.0
  %500 = vmatpush1.msra.mxu0 0.0
  %501 = vmatprep.subr.mxu0 0.0
  %502 = vmatpush1.msra.mxu0 0.0
  %503 = vmatprep.subr.mxu0 0.0
  %504 = vmatpush1.msra.mxu0 0.0
  %505 = vmatprep.subr.mxu0 0.0
  %506 = vmatpush1.msra.mxu0 0.0
  %507 = vmatprep.subr.mxu0 0.0
  %508 = vmatpush1.msra.mxu0 0.0
  %509 = vmatprep.subr.mxu0 0.0
  %510 = vmatpush1.msra.mxu0 0.0
  %511 = vmatprep.subr.mxu0 0.0
  %512 = vmatpush1.msra.mxu0 0.0
  %513 = vmatprep.subr.mxu0 0.0
  %514 = vmatpush1.msra.mxu0 0.0
  %515 = vmatprep.subr.mxu0 0.0
  %516 = vmatpush1.msra.mxu0 0.0
  %517 = vmatprep.subr.mxu0 0.0
  %518 = vmatpush1.msra.mxu0 0.0
  %519 = vmatprep.subr.mxu0 0.0
  %520 = vmatpush1.msra.mxu0 0.0
  %521 = vmatprep.subr.mxu0 0.0
  %522 = vmatpush1.msra.mxu0 0.0
  %523 = vmatprep.subr.mxu0 0.0
  %524 = vmatpush1.msra.mxu0 0.0
  %525 = vmatprep.subr.mxu0 0.0
  %526 = vmatpush1.msra.mxu0 0.0
  %527 = vmatprep.subr.mxu0 0.0
  %528 = vmatpush1.msra.mxu0 0.0
  %529 = vmatprep.subr.mxu0 0.0
  %530 = vmatpush1.msra.mxu0 0.0
  %531 = vmatprep.subr.mxu0 0.0
  %532 = vmatpush1.msra.mxu0 0.0
  %533 = vmatprep.subr.mxu0 0.0
  %534 = vmatpush1.msra.mxu0 0.0
  %535 = vmatprep.subr.mxu0 0.0
  %536 = vmatpush1.msra.mxu0 0.0
  %537 = vmatprep.subr.mxu0 0.0
  %538 = vmatpush1.msra.mxu0 0.0
  %539 = vmatprep.subr.mxu0 0.0
  %540 = vmatpush1.msra.mxu0 0.0
  %541 = vmatprep.mubr.f32.mxu0 0.0
  %v542 = vand.u32 %v278, 4294901760
  %v543 = vsub.f32 %v278, %v542
  %544 = vmatmul.mubr.f32.gmra.mrb[0].mxu0 %v543
  %v545 = vpop.f32.mrb[0].mxu0
  %v546 = vadd.f32 %v460, %v545
  %v547 = vpop.f32.mrb[0].mxu0
  %548 = vmatprep.mubr.f32.mxu0 0.0
  %v549 = vand.u32 %v281, 4294901760
  %v550 = vsub.f32 %v281, %v549
  %551 = vmatmul.mubr.f32.gmra.mrb[0].mxu0 %v550
  %v552 = vpop.f32.mrb[0].mxu0
  %v553 = vadd.f32 %v466, %v552
  %v554 = vpop.f32.mrb[0].mxu0
  %555 = vdwg.mxu0
  %556 = vmatprep.subr.mxu0 0.0
  %v557 = vand.u32 %v272, 4294901760
  %558 = vmatpush1.msra.mxu0 %v557
  %559 = vmatprep.subr.mxu0 0.0
  %v560 = vand.u32 %v273, 4294901760
  %561 = vmatpush1.msra.mxu0 %v560
  %562 = vmatprep.subr.mxu0 0.0
  %v563 = vand.u32 %v274, 4294901760
  %564 = vmatpush1.msra.mxu0 %v563
  %565 = vmatprep.subr.mxu0 0.0
  %v566 = vand.u32 %v275, 4294901760
  %567 = vmatpush1.msra.mxu0 %v566
  %568 = vmatprep.subr.mxu0 0.0
  %569 = vmatpush1.msra.mxu0 0.0
  %570 = vmatprep.subr.mxu0 0.0
  %571 = vmatpush1.msra.mxu0 0.0
  %572 = vmatprep.subr.mxu0 0.0
  %573 = vmatpush1.msra.mxu0 0.0
  %574 = vmatprep.subr.mxu0 0.0
  %575 = vmatpush1.msra.mxu0 0.0
  %576 = vmatprep.subr.mxu0 0.0
  %577 = vmatpush1.msra.mxu0 0.0
  %578 = vmatprep.subr.mxu0 0.0
  %579 = vmatpush1.msra.mxu0 0.0
  %580 = vmatprep.subr.mxu0 0.0
  %581 = vmatpush1.msra.mxu0 0.0
  %582 = vmatprep.subr.mxu0 0.0
  %583 = vmatpush1.msra.mxu0 0.0
  %584 = vmatprep.subr.mxu0 0.0
  %585 = vmatpush1.msra.mxu0 0.0
  %586 = vmatprep.subr.mxu0 0.0
  %587 = vmatpush1.msra.mxu0 0.0
  %588 = vmatprep.subr.mxu0 0.0
  %589 = vmatpush1.msra.mxu0 0.0
  %590 = vmatprep.subr.mxu0 0.0
  %591 = vmatpush1.msra.mxu0 0.0
  %592 = vmatprep.subr.mxu0 0.0
  %593 = vmatpush1.msra.mxu0 0.0
  %594 = vmatprep.subr.mxu0 0.0
  %595 = vmatpush1.msra.mxu0 0.0
  %596 = vmatprep.subr.mxu0 0.0
  %597 = vmatpush1.msra.mxu0 0.0
  %598 = vmatprep.subr.mxu0 0.0
  %599 = vmatpush1.msra.mxu0 0.0
  %600 = vmatprep.subr.mxu0 0.0
  %601 = vmatpush1.msra.mxu0 0.0
  %602 = vmatprep.subr.mxu0 0.0
  %603 = vmatpush1.msra.mxu0 0.0
  %604 = vmatprep.subr.mxu0 0.0
  %605 = vmatpush1.msra.mxu0 0.0
  %606 = vmatprep.subr.mxu0 0.0
  %607 = vmatpush1.msra.mxu0 0.0
  %608 = vmatprep.subr.mxu0 0.0
  %609 = vmatpush1.msra.mxu0 0.0
  %610 = vmatprep.subr.mxu0 0.0
  %611 = vmatpush1.msra.mxu0 0.0
  %612 = vmatprep.subr.mxu0 0.0
  %613 = vmatpush1.msra.mxu0 0.0
  %614 = vmatprep.subr.mxu0 0.0
  %615 = vmatpush1.msra.mxu0 0.0
  %616 = vmatprep.subr.mxu0 0.0
  %617 = vmatpush1.msra.mxu0 0.0
  %618 = vmatprep.subr.mxu0 0.0
  %619 = vmatpush1.msra.mxu0 0.0
  %620 = vmatprep.subr.mxu0 0.0
  %621 = vmatpush1.msra.mxu0 0.0
  %622 = vmatprep.subr.mxu0 0.0
  %623 = vmatpush1.msra.mxu0 0.0
  %624 = vmatprep.mubr.f32.mxu0 0.0
  %v625 = vand.u32 %v278, 4294901760
  %v626 = vsub.f32 %v278, %v625
  %v627 = vand.u32 %v626, 4294901760
  %628 = vmatmul.mubr.f32.gmra.mrb[0].mxu0 %v627
  %v629 = vpop.f32.mrb[0].mxu0
  %v630 = vadd.f32 %v546, %v629
  %v631 = vpop.f32.mrb[0].mxu0
  %632 = vmatprep.mubr.f32.mxu0 0.0
  %v633 = vand.u32 %v281, 4294901760
  %v634 = vsub.f32 %v281, %v633
  %v635 = vand.u32 %v634, 4294901760
  %636 = vmatmul.mubr.f32.gmra.mrb[0].mxu0 %v635
  %v637 = vpop.f32.mrb[0].mxu0
  %v638 = vadd.f32 %v553, %v637
  %v639 = vpop.f32.mrb[0].mxu0
  %640 = vdwg.mxu0
  %641 = vmatprep.subr.mxu0 0.0
  %v642 = vand.u32 %v272, 4294901760
  %v643 = vsub.f32 %v272, %v642
  %v644 = vand.u32 %v643, 4294901760
  %645 = vmatpush1.msra.mxu0 %v644
  %646 = vmatprep.subr.mxu0 0.0
  %v647 = vand.u32 %v273, 4294901760
  %v648 = vsub.f32 %v273, %v647
  %v649 = vand.u32 %v648, 4294901760
  %650 = vmatpush1.msra.mxu0 %v649
  %651 = vmatprep.subr.mxu0 0.0
  %v652 = vand.u32 %v274, 4294901760
  %v653 = vsub.f32 %v274, %v652
  %v654 = vand.u32 %v653, 4294901760
  %655 = vmatpush1.msra.mxu0 %v654
  %656 = vmatprep.subr.mxu0 0.0
  %v657 = vand.u32 %v275, 4294901760
  %v658 = vsub.f32 %v275, %v657
  %v659 = vand.u32 %v658, 4294901760
  %660 = vmatpush1.msra.mxu0 %v659
  %661 = vmatprep.subr.mxu0 0.0
  %662 = vmatpush1.msra.mxu0 0.0
  %663 = vmatprep.subr.mxu0 0.0
  %664 = vmatpush1.msra.mxu0 0.0
  %665 = vmatprep.subr.mxu0 0.0
  %666 = vmatpush1.msra.mxu0 0.0
  %667 = vmatprep.subr.mxu0 0.0
  %668 = vmatpush1.msra.mxu0 0.0
  %669 = vmatprep.subr.mxu0 0.0
  %670 = vmatpush1.msra.mxu0 0.0
  %671 = vmatprep.subr.mxu0 0.0
  %672 = vmatpush1.msra.mxu0 0.0
  %673 = vmatprep.subr.mxu0 0.0
  %674 = vmatpush1.msra.mxu0 0.0
  %675 = vmatprep.subr.mxu0 0.0
  %676 = vmatpush1.msra.mxu0 0.0
  %677 = vmatprep.subr.mxu0 0.0
  %678 = vmatpush1.msra.mxu0 0.0
  %679 = vmatprep.subr.mxu0 0.0
  %680 = vmatpush1.msra.mxu0 0.0
  %681 = vmatprep.subr.mxu0 0.0
  %682 = vmatpush1.msra.mxu0 0.0
  %683 = vmatprep.subr.mxu0 0.0
  %684 = vmatpush1.msra.mxu0 0.0
  %685 = vmatprep.subr.mxu0 0.0
  %686 = vmatpush1.msra.mxu0 0.0
  %687 = vmatprep.subr.mxu0 0.0
  %688 = vmatpush1.msra.mxu0 0.0
  %689 = vmatprep.subr.mxu0 0.0
  %690 = vmatpush1.msra.mxu0 0.0
  %691 = vmatprep.subr.mxu0 0.0
  %692 = vmatpush1.msra.mxu0 0.0
  %693 = vmatprep.subr.mxu0 0.0
  %694 = vmatpush1.msra.mxu0 0.0
  %695 = vmatprep.subr.mxu0 0.0
  %696 = vmatpush1.msra.mxu0 0.0
  %697 = vmatprep.subr.mxu0 0.0
  %698 = vmatpush1.msra.mxu0 0.0
  %699 = vmatprep.subr.mxu0 0.0
  %700 = vmatpush1.msra.mxu0 0.0
  %701 = vmatprep.subr.mxu0 0.0
  %702 = vmatpush1.msra.mxu0 0.0
  %703 = vmatprep.subr.mxu0 0.0
  %704 = vmatpush1.msra.mxu0 0.0
  %705 = vmatprep.subr.mxu0 0.0
  %706 = vmatpush1.msra.mxu0 0.0
  %707 = vmatprep.subr.mxu0 0.0
  %708 = vmatpush1.msra.mxu0 0.0
  %709 = vmatprep.subr.mxu0 0.0
  %710 = vmatpush1.msra.mxu0 0.0
  %711 = vmatprep.subr.mxu0 0.0
  %712 = vmatpush1.msra.mxu0 0.0
  %713 = vmatprep.subr.mxu0 0.0
  %714 = vmatpush1.msra.mxu0 0.0
  %715 = vmatprep.subr.mxu0 0.0
  %716 = vmatpush1.msra.mxu0 0.0
  %717 = vmatprep.mubr.f32.mxu0 0.0
  %v718 = vand.u32 %v278, 4294901760
  %719 = vmatmul.mubr.f32.gmra.mrb[0].mxu0 %v718
  %v720 = vpop.f32.mrb[0].mxu0
  %v721 = vadd.f32 %v630, %v720
  %v722 = vpop.f32.mrb[0].mxu0
  %723 = vmatprep.mubr.f32.mxu0 0.0
  %v724 = vand.u32 %v281, 4294901760
  %725 = vmatmul.mubr.f32.gmra.mrb[0].mxu0 %v724
  %v726 = vpop.f32.mrb[0].mxu0
  %v727 = vadd.f32 %v638, %v726
  %v728 = vpop.f32.mrb[0].mxu0
  %729 = vdwg.mxu0
  %730 = vmatprep.subr.mxu0 0.0
  %v731 = vand.u32 %v272, 4294901760
  %732 = vmatpush1.msra.mxu0 %v731
  %733 = vmatprep.subr.mxu0 0.0
  %v734 = vand.u32 %v273, 4294901760
  %735 = vmatpush1.msra.mxu0 %v734
  %736 = vmatprep.subr.mxu0 0.0
  %v737 = vand.u32 %v274, 4294901760
  %738 = vmatpush1.msra.mxu0 %v737
  %739 = vmatprep.subr.mxu0 0.0
  %v740 = vand.u32 %v275, 4294901760
  %741 = vmatpush1.msra.mxu0 %v740
  %742 = vmatprep.subr.mxu0 0.0
  %743 = vmatpush1.msra.mxu0 0.0
  %744 = vmatprep.subr.mxu0 0.0
  %745 = vmatpush1.msra.mxu0 0.0
  %746 = vmatprep.subr.mxu0 0.0
  %747 = vmatpush1.msra.mxu0 0.0
  %748 = vmatprep.subr.mxu0 0.0
  %749 = vmatpush1.msra.mxu0 0.0
  %750 = vmatprep.subr.mxu0 0.0
  %751 = vmatpush1.msra.mxu0 0.0
  %752 = vmatprep.subr.mxu0 0.0
  %753 = vmatpush1.msra.mxu0 0.0
  %754 = vmatprep.subr.mxu0 0.0
  %755 = vmatpush1.msra.mxu0 0.0
  %756 = vmatprep.subr.mxu0 0.0
  %757 = vmatpush1.msra.mxu0 0.0
  %758 = vmatprep.subr.mxu0 0.0
  %759 = vmatpush1.msra.mxu0 0.0
  %760 = vmatprep.subr.mxu0 0.0
  %761 = vmatpush1.msra.mxu0 0.0
  %762 = vmatprep.subr.mxu0 0.0
  %763 = vmatpush1.msra.mxu0 0.0
  %764 = vmatprep.subr.mxu0 0.0
  %765 = vmatpush1.msra.mxu0 0.0
  %766 = vmatprep.subr.mxu0 0.0
  %767 = vmatpush1.msra.mxu0 0.0
  %768 = vmatprep.subr.mxu0 0.0
  %769 = vmatpush1.msra.mxu0 0.0
  %770 = vmatprep.subr.mxu0 0.0
  %771 = vmatpush1.msra.mxu0 0.0
  %772 = vmatprep.subr.mxu0 0.0
  %773 = vmatpush1.msra.mxu0 0.0
  %774 = vmatprep.subr.mxu0 0.0
  %775 = vmatpush1.msra.mxu0 0.0
  %776 = vmatprep.subr.mxu0 0.0
  %777 = vmatpush1.msra.mxu0 0.0
  %778 = vmatprep.subr.mxu0 0.0
  %779 = vmatpush1.msra.mxu0 0.0
  %780 = vmatprep.subr.mxu0 0.0
  %781 = vmatpush1.msra.mxu0 0.0
  %782 = vmatprep.subr.mxu0 0.0
  %783 = vmatpush1.msra.mxu0 0.0
  %784 = vmatprep.subr.mxu0 0.0
  %785 = vmatpush1.msra.mxu0 0.0
  %786 = vmatprep.subr.mxu0 0.0
  %787 = vmatpush1.msra.mxu0 0.0
  %788 = vmatprep.subr.mxu0 0.0
  %789 = vmatpush1.msra.mxu0 0.0
  %790 = vmatprep.subr.mxu0 0.0
  %791 = vmatpush1.msra.mxu0 0.0
  %792 = vmatprep.subr.mxu0 0.0
  %793 = vmatpush1.msra.mxu0 0.0
  %794 = vmatprep.subr.mxu0 0.0
  %795 = vmatpush1.msra.mxu0 0.0
  %796 = vmatprep.subr.mxu0 0.0
  %797 = vmatpush1.msra.mxu0 0.0
  %798 = vmatprep.mubr.f32.mxu0 0.0
  %v799 = vand.u32 %v278, 4294901760
  %800 = vmatmul.mubr.f32.gmra.mrb[0].mxu0 %v799
  %v801 = vpop.f32.mrb[0].mxu0
  %v802 = vadd.f32 %v721, %v801
  %v803 = vpop.f32.mrb[0].mxu0
  %804 = vmatprep.mubr.f32.mxu0 0.0
  %v805 = vand.u32 %v281, 4294901760
  %806 = vmatmul.mubr.f32.gmra.mrb[0].mxu0 %v805
  %v807 = vpop.f32.mrb[0].mxu0
  %v808 = vadd.f32 %v727, %v807
  %v809 = vpop.f32.mrb[0].mxu0
  %810 = vdwg.mxu0
  %813 = vrot.lane.b32.xlu0 %v802, 4
  %v814 = vpop.permute.xlu0 %813
  %815 = vrot.lane.b32.xlu0 %v808, 4
  %v816 = vpop.permute.xlu0 %815
  %v819 = vmul.f32 %v116, %v814
  %v820 = vmul.f32 %v117, %v816
  %823 = vrot.lane.b32.xlu0 %v819, 124
  %v824 = vpop.permute.xlu0 %823
  %825 = vrot.lane.b32.xlu0 %v820, 124
  %v826 = vpop.permute.xlu0 %825
  %829 = vst.msk [vmem:[%s2] sm:$0xff] %vm95, %v824
  %830 = vst.msk [vmem:[%s2 + $0x8] sm:$0xff] %vm95, %v826
  %v831 = vld [vmem:[#allocation3] sm:$0xff]
  %v832 = vld [vmem:[#allocation3 + $0x8] sm:$0xff]
  %835 = vrot.lane.b32.xlu0 %v831, 4
  %v836 = vpop.permute.xlu0 %835
  %837 = vrot.lane.b32.xlu0 %v832, 4
  %v838 = vpop.permute.xlu0 %837
  %841 = vst.msk [vmem:[#allocation2] sm:$0xff] %vm98, %v836
  %842 = vst.msk [vmem:[#allocation2 + $0x8] sm:$0xff] %vm98, %v838
  %843 = vst.msk [vmem:[#allocation2] sm:$0xff] %vm101, 0.0
  %844 = vst.msk [vmem:[#allocation2 + $0x8] sm:$0xff] %vm101, 0.0
  %845 = vst.msk [vmem:[#allocation2] sm:$0xff] %vm104, 0.0
  %846 = vst.msk [vmem:[#allocation2 + $0x8] sm:$0xff] %vm104, 0.0
  %847 = vst.msk [vmem:[#allocation2] sm:$0xff] %vm107, 0.0
  %848 = vst.msk [vmem:[#allocation2 + $0x8] sm:$0xff] %vm107, 0.0
  %849 = vst.msk [vmem:[#allocation2] sm:$0xff] %vm110, 0.0
  %850 = vst.msk [vmem:[#allocation2 + $0x8] sm:$0xff] %vm110, 0.0
  %851 = vst.msk [vmem:[#allocation2] sm:$0xff] %vm113, 0.0
  %852 = vst.msk [vmem:[#allocation2 + $0x8] sm:$0xff] %vm113, 0.0
  %v853 = vld [vmem:[%s2] sm:$0xff]
  %v854 = vld [vmem:[%s2 + $0x8] sm:$0xff]
  %v855 = vld [vmem:[#allocation2] sm:$0xff]
  %v856 = vld [vmem:[#allocation2 + $0x8] sm:$0xff]
  %v857 = vmul.f32 %v855, -0.003819473
  %v858 = vmul.f32 %v856, -0.003819473
  %v859 = vmul.f32 %v855, -0.0010089278
  %v860 = vmul.f32 %v856, -0.0010089278
  %v861 = vmul.f32 %v855, 0.0010754839
  %v862 = vmul.f32 %v856, 0.0010754839
  %v863 = vmul.f32 %v855, 0.002357699
  %v864 = vmul.f32 %v856, 0.002357699
  %v865 = vmul.f32 %v855, 0.002790451
  %v866 = vmul.f32 %v856, 0.002790451
  %869 = vrot.lane.b32.xlu0 %v859, 127
  %v870 = vpop.permute.xlu0 %869
  %871 = vrot.lane.b32.xlu0 %v860, 127
  %v872 = vpop.permute.xlu0 %871
  %v875 = vadd.f32 %v857, %v870
  %v876 = vadd.f32 %v858, %v872
  %879 = vrot.lane.b32.xlu0 %v863, 127
  %v880 = vpop.permute.xlu0 %879
  %881 = vrot.lane.b32.xlu0 %v864, 127
  %v882 = vpop.permute.xlu0 %881
  %v885 = vadd.f32 %v861, %v880
  %v886 = vadd.f32 %v862, %v882
  %v887 = vadd.f32 %v865, %v880
  %v888 = vadd.f32 %v866, %v882
  %v889 = vadd.f32 %v861, %v870
  %v890 = vadd.f32 %v862, %v872
  %893 = vrot.lane.b32.xlu0 %v885, 126
  %v894 = vpop.permute.xlu0 %893
  %895 = vrot.lane.b32.xlu0 %v886, 126
  %v896 = vpop.permute.xlu0 %895
  %v899 = vadd.f32 %v875, %v894
  %v900 = vadd.f32 %v876, %v896
  %903 = vrot.lane.b32.xlu0 %v889, 126
  %v904 = vpop.permute.xlu0 %903
  %905 = vrot.lane.b32.xlu0 %v890, 126
  %v906 = vpop.permute.xlu0 %905
  %v909 = vadd.f32 %v887, %v904
  %v910 = vadd.f32 %v888, %v906
  %913 = vrot.lane.b32.xlu0 %v909, 124
  %v914 = vpop.permute.xlu0 %913
  %915 = vrot.lane.b32.xlu0 %v910, 124
  %v916 = vpop.permute.xlu0 %915
  %v919 = vadd.f32 %v899, %v914
  %v920 = vadd.f32 %v900, %v916
  %923 = vrot.lane.b32.xlu0 %v857, 120
  %v924 = vpop.permute.xlu0 %923
  %925 = vrot.lane.b32.xlu0 %v858, 120
  %v926 = vpop.permute.xlu0 %925
  %v929 = vadd.f32 %v919, %v924
  %v930 = vadd.f32 %v920, %v926
  %931 = vst.msk [vmem:[#allocation4] sm:$0xff] %vm95, %v929
  %932 = vst.msk [vmem:[#allocation4 + $0x8] sm:$0xff] %vm95, %v930
  %v933 = vmul.f32 %v855, 0.10981941
  %v934 = vmul.f32 %v856, 0.10981941
  %v935 = vmul.f32 %v855, 0.11078455
  %v936 = vmul.f32 %v856, 0.11078455
  %v937 = vmul.f32 %v855, 0.111479126
  %v938 = vmul.f32 %v856, 0.111479126
  %v939 = vmul.f32 %v855, 0.11189795
  %v940 = vmul.f32 %v856, 0.11189795
  %v941 = vmul.f32 %v855, 0.11203791
  %v942 = vmul.f32 %v856, 0.11203791
  %945 = vrot.lane.b32.xlu0 %v935, 127
  %v946 = vpop.permute.xlu0 %945
  %947 = vrot.lane.b32.xlu0 %v936, 127
  %v948 = vpop.permute.xlu0 %947
  %v951 = vadd.f32 %v933, %v946
  %v952 = vadd.f32 %v934, %v948
  %955 = vrot.lane.b32.xlu0 %v939, 127
  %v956 = vpop.permute.xlu0 %955
  %957 = vrot.lane.b32.xlu0 %v940, 127
  %v958 = vpop.permute.xlu0 %957
  %v961 = vadd.f32 %v937, %v956
  %v962 = vadd.f32 %v938, %v958
  %v963 = vadd.f32 %v941, %v956
  %v964 = vadd.f32 %v942, %v958
  %v965 = vadd.f32 %v937, %v946
  %v966 = vadd.f32 %v938, %v948
  %969 = vrot.lane.b32.xlu0 %v961, 126
  %v970 = vpop.permute.xlu0 %969
  %971 = vrot.lane.b32.xlu0 %v962, 126
  %v972 = vpop.permute.xlu0 %971
  %v975 = vadd.f32 %v951, %v970
  %v976 = vadd.f32 %v952, %v972
  %979 = vrot.lane.b32.xlu0 %v965, 126
  %v980 = vpop.permute.xlu0 %979
  %981 = vrot.lane.b32.xlu0 %v966, 126
  %v982 = vpop.permute.xlu0 %981
  %v985 = vadd.f32 %v963, %v980
  %v986 = vadd.f32 %v964, %v982
  %989 = vrot.lane.b32.xlu0 %v985, 124
  %v990 = vpop.permute.xlu0 %989
  %991 = vrot.lane.b32.xlu0 %v986, 124
  %v992 = vpop.permute.xlu0 %991
  %v995 = vadd.f32 %v975, %v990
  %v996 = vadd.f32 %v976, %v992
  %999 = vrot.lane.b32.xlu0 %v933, 120
  %v1000 = vpop.permute.xlu0 %999
  %1001 = vrot.lane.b32.xlu0 %v934, 120
  %v1002 = vpop.permute.xlu0 %1001
  %v1005 = vadd.f32 %v995, %v1000
  %v1006 = vadd.f32 %v996, %v1002
  %1007 = vst.msk [vmem:[#allocation4 + $0x10] sm:$0xff] %vm95, %v1005
  %1008 = vst.msk [vmem:[#allocation4 + $0x18] sm:$0xff] %vm95, %v1006
  %v1009 = vld [vmem:[%s1] sm:$0xff]
  %v1010 = vld [vmem:[%s1 + $0x8] sm:$0xff]
  %v1011 = vld [vmem:[#allocation4] sm:$0xff]
  %v1012 = vld [vmem:[#allocation4 + $0x8] sm:$0xff]
  %v1013 = vld [vmem:[#allocation4 + $0x10] sm:$0xff]
  %v1014 = vld [vmem:[#allocation4 + $0x18] sm:$0xff]
  %v1016 = vsel %vm276, %v1009, 0
  %v1019 = vsel %vm276, %v1010, 0
  %1021 = vmatprep.subr.mxu0 0.0
  %v1022 = vand.u32 %v1011, 4294901760
  %1023 = vmatpush1.msra.mxu0 %v1022
  %1024 = vmatprep.subr.mxu0 0.0
  %v1025 = vand.u32 %v1012, 4294901760
  %1026 = vmatpush1.msra.mxu0 %v1025
  %1027 = vmatprep.subr.mxu0 0.0
  %v1028 = vand.u32 %v1013, 4294901760
  %1029 = vmatpush1.msra.mxu0 %v1028
  %1030 = vmatprep.subr.mxu0 0.0
  %v1031 = vand.u32 %v1014, 4294901760
  %1032 = vmatpush1.msra.mxu0 %v1031
  %1033 = vmatprep.subr.mxu0 0.0
  %1034 = vmatpush1.msra.mxu0 0.0
  %1035 = vmatprep.subr.mxu0 0.0
  %1036 = vmatpush1.msra.mxu0 0.0
  %1037 = vmatprep.subr.mxu0 0.0
  %1038 = vmatpush1.msra.mxu0 0.0
  %1039 = vmatprep.subr.mxu0 0.0
  %1040 = vmatpush1.msra.mxu0 0.0
  %1041 = vmatprep.subr.mxu0 0.0
  %1042 = vmatpush1.msra.mxu0 0.0
  %1043 = vmatprep.subr.mxu0 0.0
  %1044 = vmatpush1.msra.mxu0 0.0
  %1045 = vmatprep.subr.mxu0 0.0
  %1046 = vmatpush1.msra.mxu0 0.0
  %1047 = vmatprep.subr.mxu0 0.0
  %1048 = vmatpush1.msra.mxu0 0.0
  %1049 = vmatprep.subr.mxu0 0.0
  %1050 = vmatpush1.msra.mxu0 0.0
  %1051 = vmatprep.subr.mxu0 0.0
  %1052 = vmatpush1.msra.mxu0 0.0
  %1053 = vmatprep.subr.mxu0 0.0
  %1054 = vmatpush1.msra.mxu0 0.0
  %1055 = vmatprep.subr.mxu0 0.0
  %1056 = vmatpush1.msra.mxu0 0.0
  %1057 = vmatprep.subr.mxu0 0.0
  %1058 = vmatpush1.msra.mxu0 0.0
  %1059 = vmatprep.subr.mxu0 0.0
  %1060 = vmatpush1.msra.mxu0 0.0
  %1061 = vmatprep.subr.mxu0 0.0
  %1062 = vmatpush1.msra.mxu0 0.0
  %1063 = vmatprep.subr.mxu0 0.0
  %1064 = vmatpush1.msra.mxu0 0.0
  %1065 = vmatprep.subr.mxu0 0.0
  %1066 = vmatpush1.msra.mxu0 0.0
  %1067 = vmatprep.subr.mxu0 0.0
  %1068 = vmatpush1.msra.mxu0 0.0
  %1069 = vmatprep.subr.mxu0 0.0
  %1070 = vmatpush1.msra.mxu0 0.0
  %1071 = vmatprep.subr.mxu0 0.0
  %1072 = vmatpush1.msra.mxu0 0.0
  %1073 = vmatprep.subr.mxu0 0.0
  %1074 = vmatpush1.msra.mxu0 0.0
  %1075 = vmatprep.subr.mxu0 0.0
  %1076 = vmatpush1.msra.mxu0 0.0
  %1077 = vmatprep.subr.mxu0 0.0
  %1078 = vmatpush1.msra.mxu0 0.0
  %1079 = vmatprep.subr.mxu0 0.0
  %1080 = vmatpush1.msra.mxu0 0.0
  %1081 = vmatprep.subr.mxu0 0.0
  %1082 = vmatpush1.msra.mxu0 0.0
  %1083 = vmatprep.subr.mxu0 0.0
  %1084 = vmatpush1.msra.mxu0 0.0
  %1085 = vmatprep.subr.mxu0 0.0
  %1086 = vmatpush1.msra.mxu0 0.0
  %1087 = vmatprep.subr.mxu0 0.0
  %1088 = vmatpush1.msra.mxu0 0.0
  %1089 = vmatprep.mubr.f32.mxu0 0.0
  %v1090 = vand.u32 %v1016, 4294901760
  %v1091 = vsub.f32 %v1016, %v1090
  %v1092 = vand.u32 %v1091, 4294901760
  %v1093 = vsub.f32 %v1091, %v1092
  %v1094 = vand.u32 %v1093, 4294901760
  %1095 = vmatmul.mubr.f32.gmra.mrb[0].mxu0 %v1094
  %v1096 = vpop.f32.mrb[0].mxu0
  %v1097 = vadd.f32 0.0, %v1096
  %v1098 = vpop.f32.mrb[0].mxu0
  %1099 = vmatprep.mubr.f32.mxu0 0.0
  %v1100 = vand.u32 %v1019, 4294901760
  %v1101 = vsub.f32 %v1019, %v1100
  %v1102 = vand.u32 %v1101, 4294901760
  %v1103 = vsub.f32 %v1101, %v1102
  %v1104 = vand.u32 %v1103, 4294901760
  %1105 = vmatmul.mubr.f32.gmra.mrb[0].mxu0 %v1104
  %v1106 = vpop.f32.mrb[0].mxu0
  %v1107 = vadd.f32 0.0, %v1106
  %v1108 = vpop.f32.mrb[0].mxu0
  %1109 = vdwg.mxu0
  %1110 = vmatprep.subr.mxu0 0.0
  %v1111 = vand.u32 %v1011, 4294901760
  %v1112 = vsub.f32 %v1011, %v1111
  %v1113 = vand.u32 %v1112, 4294901760
  %v1114 = vsub.f32 %v1112, %v1113
  %v1115 = vand.u32 %v1114, 4294901760
  %1116 = vmatpush1.msra.mxu0 %v1115
  %1117 = vmatprep.subr.mxu0 0.0
  %v1118 = vand.u32 %v1012, 4294901760
  %v1119 = vsub.f32 %v1012, %v1118
  %v1120 = vand.u32 %v1119, 4294901760
  %v1121 = vsub.f32 %v1119, %v1120
  %v1122 = vand.u32 %v1121, 4294901760
  %1123 = vmatpush1.msra.mxu0 %v1122
  %1124 = vmatprep.subr.mxu0 0.0
  %v1125 = vand.u32 %v1013, 4294901760
  %v1126 = vsub.f32 %v1013, %v1125
  %v1127 = vand.u32 %v1126, 4294901760
  %v1128 = vsub.f32 %v1126, %v1127
  %v1129 = vand.u32 %v1128, 4294901760
  %1130 = vmatpush1.msra.mxu0 %v1129
  %1131 = vmatprep.subr.mxu0 0.0
  %v1132 = vand.u32 %v1014, 4294901760
  %v1133 = vsub.f32 %v1014, %v1132
  %v1134 = vand.u32 %v1133, 4294901760
  %v1135 = vsub.f32 %v1133, %v1134
  %v1136 = vand.u32 %v1135, 4294901760
  %1137 = vmatpush1.msra.mxu0 %v1136
  %1138 = vmatprep.subr.mxu0 0.0
  %1139 = vmatpush1.msra.mxu0 0.0
  %1140 = vmatprep.subr.mxu0 0.0
  %1141 = vmatpush1.msra.mxu0 0.0
  %1142 = vmatprep.subr.mxu0 0.0
  %1143 = vmatpush1.msra.mxu0 0.0
  %1144 = vmatprep.subr.mxu0 0.0
  %1145 = vmatpush1.msra.mxu0 0.0
  %1146 = vmatprep.subr.mxu0 0.0
  %1147 = vmatpush1.msra.mxu0 0.0
  %1148 = vmatprep.subr.mxu0 0.0
  %1149 = vmatpush1.msra.mxu0 0.0
  %1150 = vmatprep.subr.mxu0 0.0
  %1151 = vmatpush1.msra.mxu0 0.0
  %1152 = vmatprep.subr.mxu0 0.0
  %1153 = vmatpush1.msra.mxu0 0.0
  %1154 = vmatprep.subr.mxu0 0.0
  %1155 = vmatpush1.msra.mxu0 0.0
  %1156 = vmatprep.subr.mxu0 0.0
  %1157 = vmatpush1.msra.mxu0 0.0
  %1158 = vmatprep.subr.mxu0 0.0
  %1159 = vmatpush1.msra.mxu0 0.0
  %1160 = vmatprep.subr.mxu0 0.0
  %1161 = vmatpush1.msra.mxu0 0.0
  %1162 = vmatprep.subr.mxu0 0.0
  %1163 = vmatpush1.msra.mxu0 0.0
  %1164 = vmatprep.subr.mxu0 0.0
  %1165 = vmatpush1.msra.mxu0 0.0
  %1166 = vmatprep.subr.mxu0 0.0
  %1167 = vmatpush1.msra.mxu0 0.0
  %1168 = vmatprep.subr.mxu0 0.0
  %1169 = vmatpush1.msra.mxu0 0.0
  %1170 = vmatprep.subr.mxu0 0.0
  %1171 = vmatpush1.msra.mxu0 0.0
  %1172 = vmatprep.subr.mxu0 0.0
  %1173 = vmatpush1.msra.mxu0 0.0
  %1174 = vmatprep.subr.mxu0 0.0
  %1175 = vmatpush1.msra.mxu0 0.0
  %1176 = vmatprep.subr.mxu0 0.0
  %1177 = vmatpush1.msra.mxu0 0.0
  %1178 = vmatprep.subr.mxu0 0.0
  %1179 = vmatpush1.msra.mxu0 0.0
  %1180 = vmatprep.subr.mxu0 0.0
  %1181 = vmatpush1.msra.mxu0 0.0
  %1182 = vmatprep.subr.mxu0 0.0
  %1183 = vmatpush1.msra.mxu0 0.0
  %1184 = vmatprep.subr.mxu0 0.0
  %1185 = vmatpush1.msra.mxu0 0.0
  %1186 = vmatprep.subr.mxu0 0.0
  %1187 = vmatpush1.msra.mxu0 0.0
  %1188 = vmatprep.subr.mxu0 0.0
  %1189 = vmatpush1.msra.mxu0 0.0
  %1190 = vmatprep.subr.mxu0 0.0
  %1191 = vmatpush1.msra.mxu0 0.0
  %1192 = vmatprep.subr.mxu0 0.0
  %1193 = vmatpush1.msra.mxu0 0.0
  %1194 = vmatprep.mubr.f32.mxu0 0.0
  %v1195 = vand.u32 %v1016, 4294901760
  %1196 = vmatmul.mubr.f32.gmra.mrb[0].mxu0 %v1195
  %v1197 = vpop.f32.mrb[0].mxu0
  %v1198 = vadd.f32 %v1097, %v1197
  %v1199 = vpop.f32.mrb[0].mxu0
  %1200 = vmatprep.mubr.f32.mxu0 0.0
  %v1201 = vand.u32 %v1019, 4294901760
  %1202 = vmatmul.mubr.f32.gmra.mrb[0].mxu0 %v1201
  %v1203 = vpop.f32.mrb[0].mxu0
  %v1204 = vadd.f32 %v1107, %v1203
  %v1205 = vpop.f32.mrb[0].mxu0
  %1206 = vdwg.mxu0
  %1207 = vmatprep.subr.mxu0 0.0
  %v1208 = vand.u32 %v1011, 4294901760
  %v1209 = vsub.f32 %v1011, %v1208
  %1210 = vmatpush1.msra.mxu0 %v1209
  %1211 = vmatprep.subr.mxu0 0.0
  %v1212 = vand.u32 %v1012, 4294901760
  %v1213 = vsub.f32 %v1012, %v1212
  %1214 = vmatpush1.msra.mxu0 %v1213
  %1215 = vmatprep.subr.mxu0 0.0
  %v1216 = vand.u32 %v1013, 4294901760
  %v1217 = vsub.f32 %v1013, %v1216
  %1218 = vmatpush1.msra.mxu0 %v1217
  %1219 = vmatprep.subr.mxu0 0.0
  %v1220 = vand.u32 %v1014, 4294901760
  %v1221 = vsub.f32 %v1014, %v1220
  %1222 = vmatpush1.msra.mxu0 %v1221
  %1223 = vmatprep.subr.mxu0 0.0
  %1224 = vmatpush1.msra.mxu0 0.0
  %1225 = vmatprep.subr.mxu0 0.0
  %1226 = vmatpush1.msra.mxu0 0.0
  %1227 = vmatprep.subr.mxu0 0.0
  %1228 = vmatpush1.msra.mxu0 0.0
  %1229 = vmatprep.subr.mxu0 0.0
  %1230 = vmatpush1.msra.mxu0 0.0
  %1231 = vmatprep.subr.mxu0 0.0
  %1232 = vmatpush1.msra.mxu0 0.0
  %1233 = vmatprep.subr.mxu0 0.0
  %1234 = vmatpush1.msra.mxu0 0.0
  %1235 = vmatprep.subr.mxu0 0.0
  %1236 = vmatpush1.msra.mxu0 0.0
  %1237 = vmatprep.subr.mxu0 0.0
  %1238 = vmatpush1.msra.mxu0 0.0
  %1239 = vmatprep.subr.mxu0 0.0
  %1240 = vmatpush1.msra.mxu0 0.0
  %1241 = vmatprep.subr.mxu0 0.0
  %1242 = vmatpush1.msra.mxu0 0.0
  %1243 = vmatprep.subr.mxu0 0.0
  %1244 = vmatpush1.msra.mxu0 0.0
  %1245 = vmatprep.subr.mxu0 0.0
  %1246 = vmatpush1.msra.mxu0 0.0
  %1247 = vmatprep.subr.mxu0 0.0
  %1248 = vmatpush1.msra.mxu0 0.0
  %1249 = vmatprep.subr.mxu0 0.0
  %1250 = vmatpush1.msra.mxu0 0.0
  %1251 = vmatprep.subr.mxu0 0.0
  %1252 = vmatpush1.msra.mxu0 0.0
  %1253 = vmatprep.subr.mxu0 0.0
  %1254 = vmatpush1.msra.mxu0 0.0
  %1255 = vmatprep.subr.mxu0 0.0
  %1256 = vmatpush1.msra.mxu0 0.0
  %1257 = vmatprep.subr.mxu0 0.0
  %1258 = vmatpush1.msra.mxu0 0.0
  %1259 = vmatprep.subr.mxu0 0.0
  %1260 = vmatpush1.msra.mxu0 0.0
  %1261 = vmatprep.subr.mxu0 0.0
  %1262 = vmatpush1.msra.mxu0 0.0
  %1263 = vmatprep.subr.mxu0 0.0
  %1264 = vmatpush1.msra.mxu0 0.0
  %1265 = vmatprep.subr.mxu0 0.0
  %1266 = vmatpush1.msra.mxu0 0.0
  %1267 = vmatprep.subr.mxu0 0.0
  %1268 = vmatpush1.msra.mxu0 0.0
  %1269 = vmatprep.subr.mxu0 0.0
  %1270 = vmatpush1.msra.mxu0 0.0
  %1271 = vmatprep.subr.mxu0 0.0
  %1272 = vmatpush1.msra.mxu0 0.0
  %1273 = vmatprep.subr.mxu0 0.0
  %1274 = vmatpush1.msra.mxu0 0.0
  %1275 = vmatprep.subr.mxu0 0.0
  %1276 = vmatpush1.msra.mxu0 0.0
  %1277 = vmatprep.subr.mxu0 0.0
  %1278 = vmatpush1.msra.mxu0 0.0
  %1279 = vmatprep.mubr.f32.mxu0 0.0
  %v1280 = vand.u32 %v1016, 4294901760
  %v1281 = vsub.f32 %v1016, %v1280
  %1282 = vmatmul.mubr.f32.gmra.mrb[0].mxu0 %v1281
  %v1283 = vpop.f32.mrb[0].mxu0
  %v1284 = vadd.f32 %v1198, %v1283
  %v1285 = vpop.f32.mrb[0].mxu0
  %1286 = vmatprep.mubr.f32.mxu0 0.0
  %v1287 = vand.u32 %v1019, 4294901760
  %v1288 = vsub.f32 %v1019, %v1287
  %1289 = vmatmul.mubr.f32.gmra.mrb[0].mxu0 %v1288
  %v1290 = vpop.f32.mrb[0].mxu0
  %v1291 = vadd.f32 %v1204, %v1290
  %v1292 = vpop.f32.mrb[0].mxu0
  %1293 = vdwg.mxu0
  %1294 = vmatprep.subr.mxu0 0.0
  %v1295 = vand.u32 %v1011, 4294901760
  %1296 = vmatpush1.msra.mxu0 %v1295
  %1297 = vmatprep.subr.mxu0 0.0
  %v1298 = vand.u32 %v1012, 4294901760
  %1299 = vmatpush1.msra.mxu0 %v1298
  %1300 = vmatprep.subr.mxu0 0.0
  %v1301 = vand.u32 %v1013, 4294901760
  %1302 = vmatpush1.msra.mxu0 %v1301
  %1303 = vmatprep.subr.mxu0 0.0
  %v1304 = vand.u32 %v1014, 4294901760
  %1305 = vmatpush1.msra.mxu0 %v1304
  %1306 = vmatprep.subr.mxu0 0.0
  %1307 = vmatpush1.msra.mxu0 0.0
  %1308 = vmatprep.subr.mxu0 0.0
  %1309 = vmatpush1.msra.mxu0 0.0
  %1310 = vmatprep.subr.mxu0 0.0
  %1311 = vmatpush1.msra.mxu0 0.0
  %1312 = vmatprep.subr.mxu0 0.0
  %1313 = vmatpush1.msra.mxu0 0.0
  %1314 = vmatprep.subr.mxu0 0.0
  %1315 = vmatpush1.msra.mxu0 0.0
  %1316 = vmatprep.subr.mxu0 0.0
  %1317 = vmatpush1.msra.mxu0 0.0
  %1318 = vmatprep.subr.mxu0 0.0
  %1319 = vmatpush1.msra.mxu0 0.0
  %1320 = vmatprep.subr.mxu0 0.0
  %1321 = vmatpush1.msra.mxu0 0.0
  %1322 = vmatprep.subr.mxu0 0.0
  %1323 = vmatpush1.msra.mxu0 0.0
  %1324 = vmatprep.subr.mxu0 0.0
  %1325 = vmatpush1.msra.mxu0 0.0
  %1326 = vmatprep.subr.mxu0 0.0
  %1327 = vmatpush1.msra.mxu0 0.0
  %1328 = vmatprep.subr.mxu0 0.0
  %1329 = vmatpush1.msra.mxu0 0.0
  %1330 = vmatprep.subr.mxu0 0.0
  %1331 = vmatpush1.msra.mxu0 0.0
  %1332 = vmatprep.subr.mxu0 0.0
  %1333 = vmatpush1.msra.mxu0 0.0
  %1334 = vmatprep.subr.mxu0 0.0
  %1335 = vmatpush1.msra.mxu0 0.0
  %1336 = vmatprep.subr.mxu0 0.0
  %1337 = vmatpush1.msra.mxu0 0.0
  %1338 = vmatprep.subr.mxu0 0.0
  %1339 = vmatpush1.msra.mxu0 0.0
  %1340 = vmatprep.subr.mxu0 0.0
  %1341 = vmatpush1.msra.mxu0 0.0
  %1342 = vmatprep.subr.mxu0 0.0
  %1343 = vmatpush1.msra.mxu0 0.0
  %1344 = vmatprep.subr.mxu0 0.0
  %1345 = vmatpush1.msra.mxu0 0.0
  %1346 = vmatprep.subr.mxu0 0.0
  %1347 = vmatpush1.msra.mxu0 0.0
  %1348 = vmatprep.subr.mxu0 0.0
  %1349 = vmatpush1.msra.mxu0 0.0
  %1350 = vmatprep.subr.mxu0 0.0
  %1351 = vmatpush1.msra.mxu0 0.0
  %1352 = vmatprep.subr.mxu0 0.0
  %1353 = vmatpush1.msra.mxu0 0.0
  %1354 = vmatprep.subr.mxu0 0.0
  %1355 = vmatpush1.msra.mxu0 0.0
  %1356 = vmatprep.subr.mxu0 0.0
  %1357 = vmatpush1.msra.mxu0 0.0
  %1358 = vmatprep.subr.mxu0 0.0
  %1359 = vmatpush1.msra.mxu0 0.0
  %1360 = vmatprep.subr.mxu0 0.0
  %1361 = vmatpush1.msra.mxu0 0.0
  %1362 = vmatprep.mubr.f32.mxu0 0.0
  %v1363 = vand.u32 %v1016, 4294901760
  %v1364 = vsub.f32 %v1016, %v1363
  %v1365 = vand.u32 %v1364, 4294901760
  %1366 = vmatmul.mubr.f32.gmra.mrb[0].mxu0 %v1365
  %v1367 = vpop.f32.mrb[0].mxu0
  %v1368 = vadd.f32 %v1284, %v1367
  %v1369 = vpop.f32.mrb[0].mxu0
  %1370 = vmatprep.mubr.f32.mxu0 0.0
  %v1371 = vand.u32 %v1019, 4294901760
  %v1372 = vsub.f32 %v1019, %v1371
  %v1373 = vand.u32 %v1372, 4294901760
  %1374 = vmatmul.mubr.f32.gmra.mrb[0].mxu0 %v1373
  %v1375 = vpop.f32.mrb[0].mxu0
  %v1376 = vadd.f32 %v1291, %v1375
  %v1377 = vpop.f32.mrb[0].mxu0
  %1378 = vdwg.mxu0
  %1379 = vmatprep.subr.mxu0 0.0
  %v1380 = vand.u32 %v1011, 4294901760
  %v1381 = vsub.f32 %v1011, %v1380
  %v1382 = vand.u32 %v1381, 4294901760
  %1383 = vmatpush1.msra.mxu0 %v1382
  %1384 = vmatprep.subr.mxu0 0.0
  %v1385 = vand.u32 %v1012, 4294901760
  %v1386 = vsub.f32 %v1012, %v1385
  %v1387 = vand.u32 %v1386, 4294901760
  %1388 = vmatpush1.msra.mxu0 %v1387
  %1389 = vmatprep.subr.mxu0 0.0
  %v1390 = vand.u32 %v1013, 4294901760
  %v1391 = vsub.f32 %v1013, %v1390
  %v1392 = vand.u32 %v1391, 4294901760
  %1393 = vmatpush1.msra.mxu0 %v1392
  %1394 = vmatprep.subr.mxu0 0.0
  %v1395 = vand.u32 %v1014, 4294901760
  %v1396 = vsub.f32 %v1014, %v1395
  %v1397 = vand.u32 %v1396, 4294901760
  %1398 = vmatpush1.msra.mxu0 %v1397
  %1399 = vmatprep.subr.mxu0 0.0
  %1400 = vmatpush1.msra.mxu0 0.0
  %1401 = vmatprep.subr.mxu0 0.0
  %1402 = vmatpush1.msra.mxu0 0.0
  %1403 = vmatprep.subr.mxu0 0.0
  %1404 = vmatpush1.msra.mxu0 0.0
  %1405 = vmatprep.subr.mxu0 0.0
  %1406 = vmatpush1.msra.mxu0 0.0
  %1407 = vmatprep.subr.mxu0 0.0
  %1408 = vmatpush1.msra.mxu0 0.0
  %1409 = vmatprep.subr.mxu0 0.0
  %1410 = vmatpush1.msra.mxu0 0.0
  %1411 = vmatprep.subr.mxu0 0.0
  %1412 = vmatpush1.msra.mxu0 0.0
  %1413 = vmatprep.subr.mxu0 0.0
  %1414 = vmatpush1.msra.mxu0 0.0
  %1415 = vmatprep.subr.mxu0 0.0
  %1416 = vmatpush1.msra.mxu0 0.0
  %1417 = vmatprep.subr.mxu0 0.0
  %1418 = vmatpush1.msra.mxu0 0.0
  %1419 = vmatprep.subr.mxu0 0.0
  %1420 = vmatpush1.msra.mxu0 0.0
  %1421 = vmatprep.subr.mxu0 0.0
  %1422 = vmatpush1.msra.mxu0 0.0
  %1423 = vmatprep.subr.mxu0 0.0
  %1424 = vmatpush1.msra.mxu0 0.0
  %1425 = vmatprep.subr.mxu0 0.0
  %1426 = vmatpush1.msra.mxu0 0.0
  %1427 = vmatprep.subr.mxu0 0.0
  %1428 = vmatpush1.msra.mxu0 0.0
  %1429 = vmatprep.subr.mxu0 0.0
  %1430 = vmatpush1.msra.mxu0 0.0
  %1431 = vmatprep.subr.mxu0 0.0
  %1432 = vmatpush1.msra.mxu0 0.0
  %1433 = vmatprep.subr.mxu0 0.0
  %1434 = vmatpush1.msra.mxu0 0.0
  %1435 = vmatprep.subr.mxu0 0.0
  %1436 = vmatpush1.msra.mxu0 0.0
  %1437 = vmatprep.subr.mxu0 0.0
  %1438 = vmatpush1.msra.mxu0 0.0
  %1439 = vmatprep.subr.mxu0 0.0
  %1440 = vmatpush1.msra.mxu0 0.0
  %1441 = vmatprep.subr.mxu0 0.0
  %1442 = vmatpush1.msra.mxu0 0.0
  %1443 = vmatprep.subr.mxu0 0.0
  %1444 = vmatpush1.msra.mxu0 0.0
  %1445 = vmatprep.subr.mxu0 0.0
  %1446 = vmatpush1.msra.mxu0 0.0
  %1447 = vmatprep.subr.mxu0 0.0
  %1448 = vmatpush1.msra.mxu0 0.0
  %1449 = vmatprep.subr.mxu0 0.0
  %1450 = vmatpush1.msra.mxu0 0.0
  %1451 = vmatprep.subr.mxu0 0.0
  %1452 = vmatpush1.msra.mxu0 0.0
  %1453 = vmatprep.subr.mxu0 0.0
  %1454 = vmatpush1.msra.mxu0 0.0
  %1455 = vmatprep.mubr.f32.mxu0 0.0
  %v1456 = vand.u32 %v1016, 4294901760
  %1457 = vmatmul.mubr.f32.gmra.mrb[0].mxu0 %v1456
  %v1458 = vpop.f32.mrb[0].mxu0
  %v1459 = vadd.f32 %v1368, %v1458
  %v1460 = vpop.f32.mrb[0].mxu0
  %1461 = vmatprep.mubr.f32.mxu0 0.0
  %v1462 = vand.u32 %v1019, 4294901760
  %1463 = vmatmul.mubr.f32.gmra.mrb[0].mxu0 %v1462
  %v1464 = vpop.f32.mrb[0].mxu0
  %v1465 = vadd.f32 %v1376, %v1464
  %v1466 = vpop.f32.mrb[0].mxu0
  %1467 = vdwg.mxu0
  %1468 = vmatprep.subr.mxu0 0.0
  %v1469 = vand.u32 %v1011, 4294901760
  %1470 = vmatpush1.msra.mxu0 %v1469
  %1471 = vmatprep.subr.mxu0 0.0
  %v1472 = vand.u32 %v1012, 4294901760
  %1473 = vmatpush1.msra.mxu0 %v1472
  %1474 = vmatprep.subr.mxu0 0.0
  %v1475 = vand.u32 %v1013, 4294901760
  %1476 = vmatpush1.msra.mxu0 %v1475
  %1477 = vmatprep.subr.mxu0 0.0
  %v1478 = vand.u32 %v1014, 4294901760
  %1479 = vmatpush1.msra.mxu0 %v1478
  %1480 = vmatprep.subr.mxu0 0.0
  %1481 = vmatpush1.msra.mxu0 0.0
  %1482 = vmatprep.subr.mxu0 0.0
  %1483 = vmatpush1.msra.mxu0 0.0
  %1484 = vmatprep.subr.mxu0 0.0
  %1485 = vmatpush1.msra.mxu0 0.0
  %1486 = vmatprep.subr.mxu0 0.0
  %1487 = vmatpush1.msra.mxu0 0.0
  %1488 = vmatprep.subr.mxu0 0.0
  %1489 = vmatpush1.msra.mxu0 0.0
  %1490 = vmatprep.subr.mxu0 0.0
  %1491 = vmatpush1.msra.mxu0 0.0
  %1492 = vmatprep.subr.mxu0 0.0
  %1493 = vmatpush1.msra.mxu0 0.0
  %1494 = vmatprep.subr.mxu0 0.0
  %1495 = vmatpush1.msra.mxu0 0.0
  %1496 = vmatprep.subr.mxu0 0.0
  %1497 = vmatpush1.msra.mxu0 0.0
  %1498 = vmatprep.subr.mxu0 0.0
  %1499 = vmatpush1.msra.mxu0 0.0
  %1500 = vmatprep.subr.mxu0 0.0
  %1501 = vmatpush1.msra.mxu0 0.0
  %1502 = vmatprep.subr.mxu0 0.0
  %1503 = vmatpush1.msra.mxu0 0.0
  %1504 = vmatprep.subr.mxu0 0.0
  %1505 = vmatpush1.msra.mxu0 0.0
  %1506 = vmatprep.subr.mxu0 0.0
  %1507 = vmatpush1.msra.mxu0 0.0
  %1508 = vmatprep.subr.mxu0 0.0
  %1509 = vmatpush1.msra.mxu0 0.0
  %1510 = vmatprep.subr.mxu0 0.0
  %1511 = vmatpush1.msra.mxu0 0.0
  %1512 = vmatprep.subr.mxu0 0.0
  %1513 = vmatpush1.msra.mxu0 0.0
  %1514 = vmatprep.subr.mxu0 0.0
  %1515 = vmatpush1.msra.mxu0 0.0
  %1516 = vmatprep.subr.mxu0 0.0
  %1517 = vmatpush1.msra.mxu0 0.0
  %1518 = vmatprep.subr.mxu0 0.0
  %1519 = vmatpush1.msra.mxu0 0.0
  %1520 = vmatprep.subr.mxu0 0.0
  %1521 = vmatpush1.msra.mxu0 0.0
  %1522 = vmatprep.subr.mxu0 0.0
  %1523 = vmatpush1.msra.mxu0 0.0
  %1524 = vmatprep.subr.mxu0 0.0
  %1525 = vmatpush1.msra.mxu0 0.0
  %1526 = vmatprep.subr.mxu0 0.0
  %1527 = vmatpush1.msra.mxu0 0.0
  %1528 = vmatprep.subr.mxu0 0.0
  %1529 = vmatpush1.msra.mxu0 0.0
  %1530 = vmatprep.subr.mxu0 0.0
  %1531 = vmatpush1.msra.mxu0 0.0
  %1532 = vmatprep.subr.mxu0 0.0
  %1533 = vmatpush1.msra.mxu0 0.0
  %1534 = vmatprep.subr.mxu0 0.0
  %1535 = vmatpush1.msra.mxu0 0.0
  %1536 = vmatprep.mubr.f32.mxu0 0.0
  %v1537 = vand.u32 %v1016, 4294901760
  %1538 = vmatmul.mubr.f32.gmra.mrb[0].mxu0 %v1537
  %v1539 = vpop.f32.mrb[0].mxu0
  %v1540 = vadd.f32 %v1459, %v1539
  %v1541 = vpop.f32.mrb[0].mxu0
  %1542 = vmatprep.mubr.f32.mxu0 0.0
  %v1543 = vand.u32 %v1019, 4294901760
  %1544 = vmatmul.mubr.f32.gmra.mrb[0].mxu0 %v1543
  %v1545 = vpop.f32.mrb[0].mxu0
  %v1546 = vadd.f32 %v1465, %v1545
  %v1547 = vpop.f32.mrb[0].mxu0
  %1548 = vdwg.mxu0
  %1551 = vrot.lane.b32.xlu0 %v1540, 4
  %v1552 = vpop.permute.xlu0 %1551
  %1553 = vrot.lane.b32.xlu0 %v1546, 4
  %v1554 = vpop.permute.xlu0 %1553
  %v1557 = vmul.f32 %v855, %v1552
  %v1558 = vmul.f32 %v856, %v1554
  %1561 = vrot.lane.b32.xlu0 %v1557, 124
  %v1562 = vpop.permute.xlu0 %1561
  %1563 = vrot.lane.b32.xlu0 %v1558, 124
  %v1564 = vpop.permute.xlu0 %1563
  %v1567 = vadd.f32 %v853, %v1562
  %v1568 = vadd.f32 %v854, %v1564
  %1569 = vst.msk [vmem:[%s2] sm:$0xff] %vm95, %v1567
  %1570 = vst.msk [vmem:[%s2 + $0x8] sm:$0xff] %vm95, %v1568
  // Predicated region
  $region10: #{new_gauss_forward.1} parent=0 // pred_check
    _
  $region11: #{new_gauss_forward.1} parent=0 // pred_check_branch
    %1572 = sbr.rel (0) target = $region13
  $region12: #{new_gauss_forward.1} parent=0 // pred_region
    _
  $region13: #{new_gauss_forward.1} parent=0 // pred_fallthru
    _
  // Predicated region
  $region14: #{new_gauss_forward.1} parent=0 // pred_check
    _
  $region15: #{new_gauss_forward.1} parent=0 // pred_check_branch
    %1574 = sbr.rel (0) target = $region17
  $region16: #{new_gauss_forward.1} parent=0 // pred_region
    _
  $region17: #{new_gauss_forward.1} parent=0 // pred_fallthru
    _

</llo_original>
